<compile_context>
chip_gen: v6e
topology: v6e:2x2x1
jax: 0.10.0
libtpu: 0.0.40
codegen_flags: <defaults>
</compile_context>

<pallas_src>
import jax
import jax.numpy as jnp
from jax.experimental import pallas as pl
from jax.experimental.pallas import tpu as pltpu


def _pad8(n):
    return -(-n // 8) * 8


def _pack_params(params):
    """Pack all layer weights + biases into ONE f32 buffer.

    Layer l occupies rows [row_off[l], row_off[l] + fan_out) (row_off is
    8-aligned so every in-kernel slice starts on a sublane-tile boundary).
    Columns [0, fan_in) hold W in nn.Linear orientation [fan_out, fan_in];
    the last column holds the bias.
    """
    max_fan_in = max(int(w.shape[1]) for w, _ in params)
    bias_col = max_fan_in
    ncols = max_fan_in + 1

    row_off, dims = [], []
    r = 0
    for w, _ in params:
        fo, fi = int(w.shape[0]), int(w.shape[1])
        row_off.append(r)
        dims.append((fi, fo))
        r += _pad8(fo)
    nrows = _pad8(r)

    buf = jnp.zeros((nrows, ncols), jnp.float32)
    for (w, b), off in zip(params, row_off):
        fo, fi = int(w.shape[0]), int(w.shape[1])
        buf = buf.at[off:off + fo, 0:fi].set(w.astype(jnp.float32))
        buf = buf.at[off:off + fo, bias_col].set(b.astype(jnp.float32))
    return buf, tuple(row_off), tuple(dims), bias_col


def _make_mlp_kernel(row_off, dims, bias_col, mxu_bf16):
    """MLP of len(dims) Linear layers (tanh after all but the last), computed
    in a transposed, lane-dense [feature, tile_n] layout."""
    num_layers = len(dims)

    def kernel(src_ref, p_ref, out_ref):
        src = src_ref[...]                       # [in_dim, tile_n] f32

        # ---- Layer 0: fused concat, tiny fan_in ----------------------------
        r0 = row_off[0]
        fi0, fo0 = dims[0]
        if fi0 <= 8:
            # VPU outer-product accumulation; avoids a K=in_dim MXU pass.
            h = p_ref[r0:r0 + fo0, 0:1] * src[0:1, :]
            for j in range(1, fi0):
                h = h + p_ref[r0:r0 + fo0, j:j + 1] * src[j:j + 1, :]
        else:
            h = jnp.dot(p_ref[r0:r0 + fo0, 0:fi0], src,
                        preferred_element_type=jnp.float32,
                        precision=jax.lax.Precision.HIGHEST)
        h = h + p_ref[r0:r0 + fo0, bias_col:bias_col + 1]
        if num_layers > 1:
            h = jnp.tanh(h)                      # EUP, full 128-lane vregs

        # ---- Layers 1..L-1: MXU matmuls [fan_out, fan_in] @ [fan_in, n] ----
        for l in range(1, num_layers):
            r = row_off[l]
            fi, fo = dims[l]
            w = p_ref[r:r + fo, 0:fi]
            b = p_ref[r:r + fo, bias_col:bias_col + 1]
            if mxu_bf16:
                y = jnp.dot(w.astype(jnp.bfloat16), h.astype(jnp.bfloat16),
                            preferred_element_type=jnp.float32)
            else:
                y = jnp.dot(w, h, preferred_element_type=jnp.float32,
                            precision=jax.lax.Precision.HIGHEST)
            h = y + b
            if l < num_layers - 1:
                h = jnp.tanh(h)

        out_ref[...] = h.astype(out_ref.dtype)   # lane-dense [2*out_dim, tile_n]

    return kernel


def _choose_tile_n(n):
    """Pick tile_n for few grid steps.

    Per-step overhead is ~0.35us while per-point compute is tiny, so fewer
    steps is better on single-TC v5e/v6e (the grid is a serial loop).  v7x has
    2 TensorCores sharded via "parallel", so prefer >= 2 steps when N allows.
    Cap at 2048: the live [hidden, tile_n] f32 activation is tile_n/32 vregs
    and HBM traffic is only ~16 B/point, so larger tiles buy nothing and add
    register pressure (sweep 512-2048 and watch spill% before raising).
    """
    for cand in (2048, 1024, 512, 256, 128):
        if n % cand == 0 and n // cand >= 2:
            return cand
    for cand in (2048, 1024, 512, 256, 128):
        if n % cand == 0:
            return cand
    return n          # single tile covering all of N (works for any N)


def pinns_forward(x, t, params, *, out_dim, tile_n=None, mxu_bf16=False):
    """PINNs forward pass.

    x : [N, dx], t : [N, dt] with dx + dt == in_dim
    params : list of (W, b) with W: [fan_out, fan_in] (nn.Linear layout),
             b: [fan_out]
    returns: complex64 array [N, out_dim]
    """
    x = jnp.asarray(x, jnp.float32)
    t = jnp.asarray(t, jnp.float32)
    n = x.shape[0]
    assert t.shape[0] == n, "x and t must share the batch dimension"
    in_dim = x.shape[1] + t.shape[1]

    num_layers = len(params)
    final_dim = int(params[-1][0].shape[0])      # 2 * out_dim
    assert final_dim == 2 * out_dim
    assert num_layers >= 2

    # Lane-dense src: concat on host, put batch N on the lane axis.
    src = jnp.concatenate([x, t], axis=-1).T     # [in_dim, N]

    p_buf, row_off, dims, bias_col = _pack_params(params)
    assert dims[0][0] == in_dim

    if tile_n is None:
        tile_n = _choose_tile_n(n)
    tile_n = min(tile_n, n)
    assert n % tile_n == 0, "N must be a multiple of tile_n"
    # TODO(synk): ragged N (n % tile_n != 0 with multiple tiles) needs a
    # masked last tile.

    grid = (n // tile_n,)
    kernel = _make_mlp_kernel(row_off, dims, bias_col, mxu_bf16)

    out = pl.pallas_call(
        kernel,
        out_shape=jax.ShapeDtypeStruct((final_dim, n), jnp.float32),
        grid_spec=pltpu.PrefetchScalarGridSpec(
            num_scalar_prefetch=0,
            grid=grid,
            in_specs=[
                pl.BlockSpec((in_dim, tile_n), lambda i: (0, i)),
                # Grid-invariant packed params: whole (tiny) buffer, block
                # index never changes so the copy is not re-issued per step.
                pl.BlockSpec(p_buf.shape, lambda i: (0, 0)),
            ],
            out_specs=pl.BlockSpec((final_dim, tile_n), lambda i: (0, i)),
        ),
        compiler_params=pltpu.CompilerParams(
            dimension_semantics=("parallel",),
            # Footprint is < 1 MiB even at tile_n=2048; this explicit cap is
            # safe on v7x (64 MiB physical) as well as v5e/v6e.
            vmem_limit_bytes=32 * 1024 * 1024,
        ),
    )(src, p_buf)

    # Cheap sublane slices of the lane-dense output, back to [N, out_dim].
    real = out[:out_dim, :].T
    imag = out[out_dim:, :].T
    return jax.lax.complex(real, imag)


def init_params(key, in_dim, hidden_dim, out_dim, num_layer):
    """nn.Linear-style init U(-1/sqrt(fan_in), 1/sqrt(fan_in)); weights stored
    in nn.Linear orientation [fan_out, fan_in]."""
    dims = [in_dim] + [hidden_dim] * (num_layer - 1) + [2 * out_dim]
    params = []
    for fan_in, fan_out in zip(dims[:-1], dims[1:]):
        key, kw, kb = jax.random.split(key, 3)
        bound = 1.0 / jnp.sqrt(jnp.float32(fan_in))
        w = jax.random.uniform(kw, (fan_out, fan_in), jnp.float32, -bound, bound)
        b = jax.random.uniform(kb, (fan_out,), jnp.float32, -bound, bound)
        params.append((w, b))
    return params


def reference_forward(x, t, params, out_dim):
    """Pure-JAX reference for correctness checking."""
    h = jnp.concatenate([x, t], axis=-1).astype(jnp.float32)
    for i, (w, b) in enumerate(params):
        h = jnp.dot(h, w.T, precision=jax.lax.Precision.HIGHEST) + b
        if i < len(params) - 1:
            h = jnp.tanh(h)
    return jax.lax.complex(h[..., :out_dim], h[..., out_dim:])


if __name__ == "__main__":
    # Small, PINN-typical shapes: x and t are each [N, 1] -> in_dim = 2.
    N = 512
    in_dim = 2
    hidden_dim = 32
    out_dim = 1
    num_layer = 4   # 3 x (Linear + tanh) + final Linear(hidden, 2*out_dim)

    key = jax.random.PRNGKey(0)
    kx, kt, kp = jax.random.split(key, 3)
    x = jax.random.uniform(kx, (N, 1), jnp.float32, -1.0, 1.0)
    t = jax.random.uniform(kt, (N, 1), jnp.float32, 0.0, 1.0)

    params = init_params(kp, in_dim, hidden_dim, out_dim, num_layer)

    # tile_n auto-picks 256 here -> 2 "parallel" grid steps (keeps both v7x
    # TensorCores busy; on single-TC v5e/v6e the one extra ~0.35us step is
    # negligible).  At large N it picks 2048-wide tiles with >= 2 steps.
    out = jax.block_until_ready(pinns_forward(x, t, params, out_dim=out_dim))

    ref = jax.block_until_ready(reference_forward(x, t, params, out_dim))
    assert out.shape == (N, out_dim)
    assert out.dtype == jnp.complex64
    assert jnp.allclose(out, ref, atol=1e-4, rtol=1e-4)

    print("KERNEL_OK")
</pallas_src>

<mosaic_0001>
module attributes {stable_mosaic.version = 11 : i64} {
  func.func @kernel(%arg0: i32, %arg1: memref<2x256xf32, #tpu.memory_space<vmem>>, %arg2: memref<104x33xf32, #tpu.memory_space<vmem>>, %arg3: memref<2x256xf32, #tpu.memory_space<vmem>>) attributes {dimension_semantics = [#tpu.dimension_semantics<parallel>], iteration_bounds = array<i64: 2>, scalar_prefetch = 0 : i64, scratch_operands = 0 : i64, tpu.core_type = #tpu.core_type<tc>, window_params = [{transform_indices = @transform_0, window_bounds = array<i64: 2, 256>}, {pipeline_mode = #tpu.pipeline_mode<synchronous>, transform_indices = @transform_1, window_bounds = array<i64: 104, 33>}, {transform_indices = @transform_2, window_bounds = array<i64: 2, 256>}]} {
    %c0 = arith.constant 0 : index
    %c0_0 = arith.constant 0 : index
    %0 = vector.load %arg1[%c0, %c0_0] : memref<2x256xf32, #tpu.memory_space<vmem>>, vector<2x256xf32>
    %c0_1 = arith.constant 0 : index
    %c0_2 = arith.constant 0 : index
    %1 = vector.load %arg2[%c0_1, %c0_2] : memref<104x33xf32, #tpu.memory_space<vmem>>, vector<32x1xf32>
    %2 = vector.extract_strided_slice %0 {offsets = [0, 0], sizes = [1, 256], strides = [1, 1]} : vector<2x256xf32> to vector<1x256xf32>
    %3 = vector.broadcast %1 : vector<32x1xf32> to vector<32x256xf32>
    %4 = vector.broadcast %2 : vector<1x256xf32> to vector<32x256xf32>
    %5 = arith.mulf %3, %4 : vector<32x256xf32>
    %c0_3 = arith.constant 0 : index
    %c1 = arith.constant 1 : index
    %6 = vector.load %arg2[%c0_3, %c1] : memref<104x33xf32, #tpu.memory_space<vmem>>, vector<32x1xf32>
    %7 = vector.extract_strided_slice %0 {offsets = [1, 0], sizes = [1, 256], strides = [1, 1]} : vector<2x256xf32> to vector<1x256xf32>
    %8 = vector.broadcast %6 : vector<32x1xf32> to vector<32x256xf32>
    %9 = vector.broadcast %7 : vector<1x256xf32> to vector<32x256xf32>
    %10 = arith.mulf %8, %9 : vector<32x256xf32>
    %11 = arith.addf %5, %10 : vector<32x256xf32>
    %c0_4 = arith.constant 0 : index
    %c32 = arith.constant 32 : index
    %12 = vector.load %arg2[%c0_4, %c32] : memref<104x33xf32, #tpu.memory_space<vmem>>, vector<32x1xf32>
    %13 = vector.broadcast %12 : vector<32x1xf32> to vector<32x256xf32>
    %14 = arith.addf %11, %13 : vector<32x256xf32>
    %15 = math.tanh %14 : vector<32x256xf32>
    %c32_5 = arith.constant 32 : index
    %c0_6 = arith.constant 0 : index
    %16 = vector.load %arg2[%c32_5, %c0_6] : memref<104x33xf32, #tpu.memory_space<vmem>>, vector<32x32xf32>
    %c32_7 = arith.constant 32 : index
    %c32_8 = arith.constant 32 : index
    %17 = vector.load %arg2[%c32_7, %c32_8] : memref<104x33xf32, #tpu.memory_space<vmem>>, vector<32x1xf32>
    %cst = arith.constant dense<0.000000e+00> : vector<32x256xf32>
    %18 = tpu.matmul %16, %15, %cst {dimension_numbers = #tpu.dot_dimension_numbers<[1], [0], [0], [1], [0, 0, 1, 1], [], []>, precision = #tpu.contract_precision<fp32>} : vector<32x32xf32>, vector<32x256xf32>, vector<32x256xf32> -> vector<32x256xf32>
    %19 = vector.broadcast %17 : vector<32x1xf32> to vector<32x256xf32>
    %20 = arith.addf %18, %19 : vector<32x256xf32>
    %21 = math.tanh %20 : vector<32x256xf32>
    %c64 = arith.constant 64 : index
    %c0_9 = arith.constant 0 : index
    %22 = vector.load %arg2[%c64, %c0_9] : memref<104x33xf32, #tpu.memory_space<vmem>>, vector<32x32xf32>
    %c64_10 = arith.constant 64 : index
    %c32_11 = arith.constant 32 : index
    %23 = vector.load %arg2[%c64_10, %c32_11] : memref<104x33xf32, #tpu.memory_space<vmem>>, vector<32x1xf32>
    %cst_12 = arith.constant dense<0.000000e+00> : vector<32x256xf32>
    %24 = tpu.matmul %22, %21, %cst_12 {dimension_numbers = #tpu.dot_dimension_numbers<[1], [0], [0], [1], [0, 0, 1, 1], [], []>, precision = #tpu.contract_precision<fp32>} : vector<32x32xf32>, vector<32x256xf32>, vector<32x256xf32> -> vector<32x256xf32>
    %25 = vector.broadcast %23 : vector<32x1xf32> to vector<32x256xf32>
    %26 = arith.addf %24, %25 : vector<32x256xf32>
    %27 = math.tanh %26 : vector<32x256xf32>
    %c96 = arith.constant 96 : index
    %c0_13 = arith.constant 0 : index
    %28 = vector.load %arg2[%c96, %c0_13] : memref<104x33xf32, #tpu.memory_space<vmem>>, vector<2x32xf32>
    %c96_14 = arith.constant 96 : index
    %c32_15 = arith.constant 32 : index
    %29 = vector.load %arg2[%c96_14, %c32_15] : memref<104x33xf32, #tpu.memory_space<vmem>>, vector<2x1xf32>
    %cst_16 = arith.constant dense<0.000000e+00> : vector<2x256xf32>
    %30 = tpu.matmul %28, %27, %cst_16 {dimension_numbers = #tpu.dot_dimension_numbers<[1], [0], [0], [1], [0, 0, 1, 1], [], []>, precision = #tpu.contract_precision<fp32>} : vector<2x32xf32>, vector<32x256xf32>, vector<2x256xf32> -> vector<2x256xf32>
    %31 = vector.broadcast %29 : vector<2x1xf32> to vector<2x256xf32>
    %32 = arith.addf %30, %31 : vector<2x256xf32>
    %c0_17 = arith.constant 0 : index
    %c0_18 = arith.constant 0 : index
    %33 = vector.load %arg3[%c0_17, %c0_18] : memref<2x256xf32, #tpu.memory_space<vmem>>, vector<2x256xf32>
    tpu.vector_store %arg3[%c0_17, %c0_18], %32 {strides = array<i32>} : memref<2x256xf32, #tpu.memory_space<vmem>>, vector<2x256xf32>,
    return
  }
  func.func @transform_0(%arg0: i32) -> (i32, i32) {
    %c0_i32 = arith.constant 0 : i32
    %c0_i32_0 = arith.constant 0 : i32
    return %c0_i32, %arg0 : i32, i32
  }
  func.func @transform_1(%arg0: i32) -> (i32, i32) {
    %c0_i32 = arith.constant 0 : i32
    %c0_i32_0 = arith.constant 0 : i32
    %c0_i32_1 = arith.constant 0 : i32
    return %c0_i32, %c0_i32_0 : i32, i32
  }
  func.func @transform_2(%arg0: i32) -> (i32, i32) {
    %c0_i32 = arith.constant 0 : i32
    %c0_i32_0 = arith.constant 0 : i32
    return %c0_i32, %arg0 : i32, i32
  }
}

</mosaic_0001>

<llo_original>
// kernel: tpu_custom_call.1
$region0: #{tpu_custom_call.1}
  #allocation0 [shape = 'u32[]', space=smem, size = 0x4, offset = 0x4, fixed_abs, tag = 'smem constant byte address 0x4 - core index']
  #allocation1 [shape = 'u32[144,128]{1,0:T(1,128)}', space=vmem, size = 0x12000, scoped, tag = 'internal scratch']
  %s0 = inlined_call_operand.vmem [shape: f32[2,512], index: 0, kind: input, shape index: {}]
  %s1 = inlined_call_operand.vmem [shape: f32[104,33], index: 1, kind: input, shape index: {}]
  %s2 = inlined_call_operand.hbm [shape: f32[2,512], index: 2, kind: output, shape index: {}]
  %s3 = sld [smem:[#allocation0]]
  $region41: #{tpu_custom_call.1} parent=0
    _
  %s5 = ssub.s32 1, %s3
  %s6 = scalar_select 0, %s5, %s3
  $region1: #{tpu_custom_call.1} parent=0
    #allocation2 [shape = 'u8[4096]{0}', space=vmem, size = 0x1000, scoped, tag = 'output window, operand 0']
    #allocation3 [shape = 's32[2]{0}', space=sflag, size = 0x8, scoped, tag = 'scoped memory for tpu_custom_call.1']
    %7 = vsyncpa [#allocation3], 0
    %s8 = scalar_lea.sflag [#allocation3], 1
    %9 = vsyncpa %s8, 0
    loop: start=0, step=1, limit=4
    $region2: #{tpu_custom_call.1} parent=1 // loop_pre_header
      _
    $region3: #{tpu_custom_call.1} parent=1 // loop_header
      %s11 = sphi 0, %s15
      %p12 = scmp.ge.s32.totalorder %s11, 4
      %s21 = sphi 0, %s23
      %s24 = sphi 0, %s21
      %s25 = sphi 0, %s24
      %s41 = sphi 0, %s25
      %s45 = sphi 0, %s45
      %s47 = sphi 0, %s45
      %s48 = sphi 0, %s47
      %s62 = sphi 0, %s48
      %s68 = sphi 0, %s70
      %s71 = sphi 0, %s68
      %s72 = sphi 0, %s71
      %s88 = sphi 0, %s72
    $region4: #{tpu_custom_call.1} parent=1 // loop_header_branch
      %14 = sbr.rel (%p12) target = $region8
    $region5: #{tpu_custom_call.1} parent=1 // loop_body
      %s16 = ssub.s32 %s11, 1
      %s17 = ssub.s32 %s11, 2
      %s18 = sadd.s32 %s11, 1
      %s19 = ssub.s32 %s11, %s18
      %p20 = scmp.eq.s32.totalorder %s19, 0
      %s22 = sadd.s32 %s21, 1
      %s23 = scalar_select %p20, %s21, %s22
      %p26 = pneg %p20
      %p27 = scmp.eq.s32.totalorder %s11, 1
      %p28 = por %p26, %p27
      %p29 = scmp.ne.s32.totalorder %s21, %s24
      %p30 = scmp.eq.s32.totalorder %s11, 0
      %p31 = por %p29, %p30
      %p32 = scmp.ne.s32.totalorder %s21, %s24
      %p33 = scmp.eq.s32.totalorder %s16, 1
      %p34 = por %p32, %p33
      %p35 = scmp.ne.s32.totalorder %s24, %s25
      %p36 = scmp.eq.s32.totalorder %s16, 0
      %p37 = por %p35, %p36
      %p38 = scmp.ne.s32.totalorder %s24, %s25
      %p39 = scmp.eq.s32.totalorder %s17, 1
      %p40 = por %p38, %p39
      %p42 = scmp.ne.s32.totalorder %s25, %s41
      %p43 = scmp.eq.s32.totalorder %s17, 0
      %p44 = por %p42, %p43
      %s46 = sadd.s32 %s45, 1
      %p49 = scmp.eq.s32.totalorder %s11, 1
      %p50 = scmp.ne.s32.totalorder %s45, %s47
      %p51 = scmp.eq.s32.totalorder %s11, 0
      %p52 = por %p50, %p51
      %p53 = scmp.ne.s32.totalorder %s45, %s47
      %p54 = scmp.eq.s32.totalorder %s16, 1
      %p55 = por %p53, %p54
      %p56 = scmp.ne.s32.totalorder %s47, %s48
      %p57 = scmp.eq.s32.totalorder %s16, 0
      %p58 = por %p56, %p57
      %p59 = scmp.ne.s32.totalorder %s47, %s48
      %p60 = scmp.eq.s32.totalorder %s17, 1
      %p61 = por %p59, %p60
      %p63 = scmp.ne.s32.totalorder %s48, %s62
      %p64 = scmp.eq.s32.totalorder %s17, 0
      %p65 = por %p63, %p64
      %s66 = ssub.s32 %s11, %s18
      %p67 = scmp.eq.s32.totalorder %s66, 0
      %s69 = sadd.s32 %s68, 1
      %s70 = scalar_select %p67, %s68, %s69
      %p73 = pneg %p67
      %p74 = scmp.eq.s32.totalorder %s11, 1
      %p75 = por %p73, %p74
      %p76 = scmp.ne.s32.totalorder %s68, %s71
      %p77 = scmp.eq.s32.totalorder %s11, 0
      %p78 = por %p76, %p77
      %p79 = scmp.ne.s32.totalorder %s68, %s71
      %p80 = scmp.eq.s32.totalorder %s16, 1
      %p81 = por %p79, %p80
      %p82 = scmp.ne.s32.totalorder %s71, %s72
      %p83 = scmp.eq.s32.totalorder %s16, 0
      %p84 = por %p82, %p83
      %p85 = scmp.ne.s32.totalorder %s71, %s72
      %p86 = scmp.eq.s32.totalorder %s17, 1
      %p87 = por %p85, %p86
      %p89 = scmp.ne.s32.totalorder %s72, %s88
      %p90 = scmp.eq.s32.totalorder %s17, 0
      %p91 = por %p89, %p90
      %p92 = scmp.le.s32.totalorder 1, %s11
      %p93 = scmp.lt.s32.totalorder %s11, 3
      %p94 = pnand %p92, %p93
      %p95 = pneg %p94
      // Predicated region
      $region9: #{tpu_custom_call.1} parent=5 // pred_check
        _
      $region10: #{tpu_custom_call.1} parent=5 // pred_check_branch
        %97 = sbr.rel (%p94) target = $region12
      $region11: #{tpu_custom_call.1} parent=5 // pred_region
        %s98 = ssub.s32 %s11, 1
        // Predicated region
        $region13: #{tpu_custom_call.1} parent=11 // pred_check
          %p99 = pneg %p58
        $region14: #{tpu_custom_call.1} parent=11 // pred_check_branch
          %101 = sbr.rel (%p99) target = $region16
        $region15: #{tpu_custom_call.1} parent=11 // pred_region
          _
        $region16: #{tpu_custom_call.1} parent=11 // pred_fallthru
          _
      $region12: #{tpu_custom_call.1} parent=5 // pred_fallthru
        _
      %p102 = scmp.lt.s32.totalorder %s11, 2
      // Predicated region
      $region17: #{tpu_custom_call.1} parent=5 // pred_check
        %p103 = pneg %p102
      $region18: #{tpu_custom_call.1} parent=5 // pred_check_branch
        %105 = sbr.rel (%p103) target = $region20
      $region19: #{tpu_custom_call.1} parent=5 // pred_region
        // Predicated region
        $region21: #{tpu_custom_call.1} parent=19 // pred_check
          %p106 = pneg %p31
        $region22: #{tpu_custom_call.1} parent=19 // pred_check_branch
          %108 = sbr.rel (%p106) target = $region24
        $region23: #{tpu_custom_call.1} parent=19 // pred_region
          %s109 = smul.u32 2, %s11
          %p110 = scmp.lt.s32.totalorder %s109, 3
          %s111 = scalar_select %p110, %s109, 3
          %s112 = smul.addr %s111, 2
          %s113 = scalar_lea.vmem %s0, %s112
          %s114 = smul.u32 2, %s11
        $region24: #{tpu_custom_call.1} parent=19 // pred_fallthru
          _
      $region20: #{tpu_custom_call.1} parent=5 // pred_fallthru
        _
      %p115 = scmp.le.s32.totalorder 1, %s11
      %p116 = scmp.lt.s32.totalorder %s11, 3
      %p117 = pnand %p115, %p116
      %p118 = pneg %p117
      // Predicated region
      $region25: #{tpu_custom_call.1} parent=5 // pred_check
        _
      $region26: #{tpu_custom_call.1} parent=5 // pred_check_branch
        %120 = sbr.rel (%p117) target = $region28
      $region27: #{tpu_custom_call.1} parent=5 // pred_region
        %s121 = ssub.s32 %s11, 1
        %s122 = smul.u32 2, %s16
        %p123 = scmp.lt.s32.totalorder %s122, 3
        %s124 = scalar_select %p123, %s122, 3
        %s125 = smul.addr %s124, 2
        %s126 = scalar_lea.vmem %s0, %s125
        %p127 = pneg %p37
        %p128 = pneg %p34
        %p129 = pneg %p58
        %p130 = pneg %p55
        %p131 = pneg %p84
        %p132 = pneg %p81
        %s133 = sand.u32 %s71, 1
        %s134 = scalar_lea.sflag [#allocation3], %s133
        %s135 = sand.u32 %s71, 1
        %s136 = smul.addr %s135, 4
        %s137 = scalar_lea.vmem [#allocation2], %s136
        %s138 = smul.u32 2, %s16
        %p139 = scmp.lt.s32.totalorder %s138, 3
        %s140 = scalar_select %p139, %s138, 3
        %s141 = smul.addr %s140, 2
        %s142 = scalar_lea.vmem %s0, %s141
        %s143 = smul.u32 2, %s16
        %s144 = smul.u32 2, %s16
        %v145 = vld [vmem:[%s142] sm:$0xf]
        %v146 = vld [vmem:[%s1] sm:$0xff]
        %v147 = vld [vmem:[%s1 + $0x8] sm:$0xff]
        %v148 = vld [vmem:[%s1 + $0x10] sm:$0xff]
        %v149 = vld [vmem:[%s1 + $0x18] sm:$0xff]
        %151 = vset.pattern.permute.xlu0 0
        %152 = vperm.xlu0 %151, %v146
        %v153 = vpop.permute.xlu0 %152
        %156 = vset.pattern.permute.xlu0 0
        %157 = vperm.xlu0 %156, %v147
        %v158 = vpop.permute.xlu0 %157
        %161 = vset.pattern.permute.xlu0 0
        %162 = vperm.xlu0 %161, %v148
        %v163 = vpop.permute.xlu0 %162
        %166 = vset.pattern.permute.xlu0 0
        %167 = vperm.xlu0 %166, %v149
        %v168 = vpop.permute.xlu0 %167
        %v171 = vlaneseq
        %v172 = vshrl.u32 %v171, 7
        %v173 = vsub.s32 0, %v172
        %v174 = vrot.slane %v145, %v173
        %v175 = vlaneseq
        %v176 = vshrl.u32 %v175, 7
        %v177 = vsub.s32 2, %v176
        %v178 = vrot.slane %v145, %v177
        %v181 = vlaneseq
        %v182 = vshrl.u32 %v181, 7
        %v183 = vsub.s32 0, %v182
        %v184 = vrot.slane %v174, %v183
        %v185 = vlaneseq
        %v186 = vshrl.u32 %v185, 7
        %v187 = vsub.s32 0, %v186
        %v188 = vrot.slane %v178, %v187
        %v189 = vmul.f32 %v153, %v184
        %v190 = vmul.f32 %v153, %v188
        %v191 = vmul.f32 %v158, %v184
        %v192 = vmul.f32 %v158, %v188
        %v193 = vmul.f32 %v163, %v184
        %v194 = vmul.f32 %v163, %v188
        %v195 = vmul.f32 %v168, %v184
        %v196 = vmul.f32 %v168, %v188
        %197 = vset.pattern.permute.xlu0 1
        %198 = vperm.xlu0 %197, %v146
        %v199 = vpop.permute.xlu0 %198
        %201 = vset.pattern.permute.xlu0 1
        %202 = vperm.xlu0 %201, %v147
        %v203 = vpop.permute.xlu0 %202
        %205 = vset.pattern.permute.xlu0 1
        %206 = vperm.xlu0 %205, %v148
        %v207 = vpop.permute.xlu0 %206
        %209 = vset.pattern.permute.xlu0 1
        %210 = vperm.xlu0 %209, %v149
        %v211 = vpop.permute.xlu0 %210
        %v213 = vlaneseq
        %v214 = vshrl.u32 %v213, 7
        %v215 = vsub.s32 1, %v214
        %v216 = vrot.slane %v145, %v215
        %v217 = vlaneseq
        %v218 = vshrl.u32 %v217, 7
        %v219 = vsub.s32 3, %v218
        %v220 = vrot.slane %v145, %v219
        %v223 = vlaneseq
        %v224 = vshrl.u32 %v223, 7
        %v225 = vsub.s32 1, %v224
        %v226 = vrot.slane %v216, %v225
        %v227 = vlaneseq
        %v228 = vshrl.u32 %v227, 7
        %v229 = vsub.s32 1, %v228
        %v230 = vrot.slane %v220, %v229
        %v231 = vmul.f32 %v199, %v226
        %v232 = vmul.f32 %v199, %v230
        %v233 = vmul.f32 %v203, %v226
        %v234 = vmul.f32 %v203, %v230
        %v235 = vmul.f32 %v207, %v226
        %v236 = vmul.f32 %v207, %v230
        %v237 = vmul.f32 %v211, %v226
        %v238 = vmul.f32 %v211, %v230
        %v239 = vadd.f32 %v189, %v231
        %v240 = vadd.f32 %v190, %v232
        %v241 = vadd.f32 %v191, %v233
        %v242 = vadd.f32 %v192, %v234
        %v243 = vadd.f32 %v193, %v235
        %v244 = vadd.f32 %v194, %v236
        %v245 = vadd.f32 %v195, %v237
        %v246 = vadd.f32 %v196, %v238
        %247 = vset.pattern.permute.xlu0 32
        %248 = vperm.xlu0 %247, %v146
        %v249 = vpop.permute.xlu0 %248
        %251 = vset.pattern.permute.xlu0 32
        %252 = vperm.xlu0 %251, %v147
        %v253 = vpop.permute.xlu0 %252
        %255 = vset.pattern.permute.xlu0 32
        %256 = vperm.xlu0 %255, %v148
        %v257 = vpop.permute.xlu0 %256
        %259 = vset.pattern.permute.xlu0 32
        %260 = vperm.xlu0 %259, %v149
        %v261 = vpop.permute.xlu0 %260
        %v263 = vadd.f32 %v239, %v249
        %v264 = vadd.f32 %v240, %v249
        %v265 = vadd.f32 %v241, %v253
        %v266 = vadd.f32 %v242, %v253
        %v267 = vadd.f32 %v243, %v257
        %v268 = vadd.f32 %v244, %v257
        %v269 = vadd.f32 %v245, %v261
        %v270 = vadd.f32 %v246, %v261
        %v271 = vtanh.pop %v263
        %v272 = vtanh.pop %v264
        %v273 = vtanh.pop %v265
        %v274 = vtanh.pop %v266
        %v275 = vtanh.pop %v267
        %v276 = vtanh.pop %v268
        %v277 = vtanh.pop %v269
        %v278 = vtanh.pop %v270
        %v279 = vld [vmem:[%s1 + $0x20] sm:$0xff]
        %v280 = vld [vmem:[%s1 + $0x28] sm:$0xff]
        %v281 = vld [vmem:[%s1 + $0x30] sm:$0xff]
        %v282 = vld [vmem:[%s1 + $0x38] sm:$0xff]
        %284 = vset.pattern.permute.xlu0 32
        %285 = vperm.xlu0 %284, %v279
        %v286 = vpop.permute.xlu0 %285
        %289 = vset.pattern.permute.xlu0 32
        %290 = vperm.xlu0 %289, %v280
        %v291 = vpop.permute.xlu0 %290
        %294 = vset.pattern.permute.xlu0 32
        %295 = vperm.xlu0 %294, %v281
        %v296 = vpop.permute.xlu0 %295
        %299 = vset.pattern.permute.xlu0 32
        %300 = vperm.xlu0 %299, %v282
        %v301 = vpop.permute.xlu0 %300
        %vm303 = vcmask 261120
        %v304 = vsel %vm303, %v279, 0
        %v306 = vsel %vm303, %v280, 0
        %v308 = vsel %vm303, %v281, 0
        %v310 = vsel %vm303, %v282, 0
        %312 = vmatprep.subr.mxu0 0.0
        %313 = vmatpush1.msra.mxu0 0.0
        %314 = vmatprep.subr.mxu0 0.0
        %315 = vmatpush1.msra.mxu0 0.0
        %316 = vmatprep.subr.mxu0 0.0
        %317 = vmatpush1.msra.mxu0 0.0
        %318 = vmatprep.subr.mxu0 0.0
        %319 = vmatpush1.msra.mxu0 0.0
        %320 = vmatprep.subr.mxu0 0.0
        %321 = vmatpush1.msra.mxu0 0.0
        %322 = vmatprep.subr.mxu0 0.0
        %323 = vmatpush1.msra.mxu0 0.0
        %324 = vmatprep.subr.mxu0 0.0
        %325 = vmatpush1.msra.mxu0 0.0
        %326 = vmatprep.subr.mxu0 0.0
        %327 = vmatpush1.msra.mxu0 0.0
        %328 = vmatprep.subr.mxu0 0.0
        %329 = vmatpush1.msra.mxu0 0.0
        %330 = vmatprep.subr.mxu0 0.0
        %331 = vmatpush1.msra.mxu0 0.0
        %332 = vmatprep.subr.mxu0 0.0
        %333 = vmatpush1.msra.mxu0 0.0
        %334 = vmatprep.subr.mxu0 0.0
        %335 = vmatpush1.msra.mxu0 0.0
        %v336 = vand.u32 %v278, 4294901760
        %337 = vmatprep.subr.mxu0 %v336
        %v338 = vand.u32 %v277, 4294901760
        %339 = vmatpush1.msra.mxu0 %v338
        %v340 = vand.u32 %v276, 4294901760
        %341 = vmatprep.subr.mxu0 %v340
        %v342 = vand.u32 %v275, 4294901760
        %343 = vmatpush1.msra.mxu0 %v342
        %v344 = vand.u32 %v274, 4294901760
        %345 = vmatprep.subr.mxu0 %v344
        %v346 = vand.u32 %v273, 4294901760
        %347 = vmatpush1.msra.mxu0 %v346
        %v348 = vand.u32 %v272, 4294901760
        %349 = vmatprep.subr.mxu0 %v348
        %v350 = vand.u32 %v271, 4294901760
        %351 = vmatpush1.msra.mxu0 %v350
        %352 = vmatprep.subr.mxu0 0.0
        %353 = vmatpush2.msra.mxu0 0.0
        %354 = vmatprep.subr.mxu0 0.0
        %355 = vmatpush2.msra.mxu0 0.0
        %356 = vmatprep.subr.mxu0 0.0
        %357 = vmatpush2.msra.mxu0 0.0
        %358 = vmatprep.subr.mxu0 0.0
        %359 = vmatpush2.msra.mxu0 0.0
        %360 = vmatprep.subr.mxu0 0.0
        %361 = vmatpush2.msra.mxu0 0.0
        %362 = vmatprep.subr.mxu0 0.0
        %363 = vmatpush2.msra.mxu0 0.0
        %364 = vmatprep.subr.mxu0 0.0
        %365 = vmatpush2.msra.mxu0 0.0
        %366 = vmatprep.subr.mxu0 0.0
        %367 = vmatpush2.msra.mxu0 0.0
        %368 = vmatprep.subr.mxu0 0.0
        %369 = vmatpush2.msra.mxu0 0.0
        %370 = vmatprep.subr.mxu0 0.0
        %371 = vmatpush2.msra.mxu0 0.0
        %372 = vmatprep.subr.mxu0 0.0
        %373 = vmatpush2.msra.mxu0 0.0
        %374 = vmatprep.subr.mxu0 0.0
        %375 = vmatpush2.msra.mxu0 0.0
        %376 = vmatprep.subr.mxu0 0.0
        %377 = vmatpush2.msra.mxu0 0.0
        %378 = vmatprep.subr.mxu0 0.0
        %379 = vmatpush2.msra.mxu0 0.0
        %380 = vmatprep.subr.mxu0 0.0
        %381 = vmatpush2.msra.mxu0 0.0
        %382 = vmatprep.subr.mxu0 0.0
        %383 = vmatpush2.msra.mxu0 0.0
        %384 = vmatprep.mubr.f32.mxu0 0.0
        %v385 = vand.u32 %v304, 4294901760
        %v386 = vsub.f32 %v304, %v385
        %v387 = vand.u32 %v386, 4294901760
        %v388 = vsub.f32 %v386, %v387
        %v389 = vand.u32 %v388, 4294901760
        %390 = vmatmul.mubr.f32.gmra.mxu0 %v389
        %v391 = vpop.f32.mrf.mxu0
        %v392 = vadd.f32 %v286, %v391
        %v393 = vpop.f32.mrf.mxu0
        %v394 = vadd.f32 %v286, %v393
        %395 = vmatprep.mubr.f32.mxu0 0.0
        %v396 = vand.u32 %v306, 4294901760
        %v397 = vsub.f32 %v306, %v396
        %v398 = vand.u32 %v397, 4294901760
        %v399 = vsub.f32 %v397, %v398
        %v400 = vand.u32 %v399, 4294901760
        %401 = vmatmul.mubr.f32.gmra.mxu0 %v400
        %v402 = vpop.f32.mrf.mxu0
        %v403 = vadd.f32 %v291, %v402
        %v404 = vpop.f32.mrf.mxu0
        %v405 = vadd.f32 %v291, %v404
        %406 = vmatprep.mubr.f32.mxu0 0.0
        %v407 = vand.u32 %v308, 4294901760
        %v408 = vsub.f32 %v308, %v407
        %v409 = vand.u32 %v408, 4294901760
        %v410 = vsub.f32 %v408, %v409
        %v411 = vand.u32 %v410, 4294901760
        %412 = vmatmul.mubr.f32.gmra.mxu0 %v411
        %v413 = vpop.f32.mrf.mxu0
        %v414 = vadd.f32 %v296, %v413
        %v415 = vpop.f32.mrf.mxu0
        %v416 = vadd.f32 %v296, %v415
        %417 = vmatprep.mubr.f32.mxu0 0.0
        %v418 = vand.u32 %v310, 4294901760
        %v419 = vsub.f32 %v310, %v418
        %v420 = vand.u32 %v419, 4294901760
        %v421 = vsub.f32 %v419, %v420
        %v422 = vand.u32 %v421, 4294901760
        %423 = vmatmul.mubr.f32.gmra.mxu0 %v422
        %v424 = vpop.f32.mrf.mxu0
        %v425 = vadd.f32 %v301, %v424
        %v426 = vpop.f32.mrf.mxu0
        %v427 = vadd.f32 %v301, %v426
        %428 = vdwg.mxu0
        %429 = vmatprep.subr.mxu0 0.0
        %430 = vmatpush1.msra.mxu0 0.0
        %431 = vmatprep.subr.mxu0 0.0
        %432 = vmatpush1.msra.mxu0 0.0
        %433 = vmatprep.subr.mxu0 0.0
        %434 = vmatpush1.msra.mxu0 0.0
        %435 = vmatprep.subr.mxu0 0.0
        %436 = vmatpush1.msra.mxu0 0.0
        %437 = vmatprep.subr.mxu0 0.0
        %438 = vmatpush1.msra.mxu0 0.0
        %439 = vmatprep.subr.mxu0 0.0
        %440 = vmatpush1.msra.mxu0 0.0
        %441 = vmatprep.subr.mxu0 0.0
        %442 = vmatpush1.msra.mxu0 0.0
        %443 = vmatprep.subr.mxu0 0.0
        %444 = vmatpush1.msra.mxu0 0.0
        %445 = vmatprep.subr.mxu0 0.0
        %446 = vmatpush1.msra.mxu0 0.0
        %447 = vmatprep.subr.mxu0 0.0
        %448 = vmatpush1.msra.mxu0 0.0
        %449 = vmatprep.subr.mxu0 0.0
        %450 = vmatpush1.msra.mxu0 0.0
        %451 = vmatprep.subr.mxu0 0.0
        %452 = vmatpush1.msra.mxu0 0.0
        %v453 = vand.u32 %v278, 4294901760
        %v454 = vsub.f32 %v278, %v453
        %v455 = vand.u32 %v454, 4294901760
        %v456 = vsub.f32 %v454, %v455
        %v457 = vand.u32 %v456, 4294901760
        %458 = vmatprep.subr.mxu0 %v457
        %v459 = vand.u32 %v277, 4294901760
        %v460 = vsub.f32 %v277, %v459
        %v461 = vand.u32 %v460, 4294901760
        %v462 = vsub.f32 %v460, %v461
        %v463 = vand.u32 %v462, 4294901760
        %464 = vmatpush1.msra.mxu0 %v463
        %v465 = vand.u32 %v276, 4294901760
        %v466 = vsub.f32 %v276, %v465
        %v467 = vand.u32 %v466, 4294901760
        %v468 = vsub.f32 %v466, %v467
        %v469 = vand.u32 %v468, 4294901760
        %470 = vmatprep.subr.mxu0 %v469
        %v471 = vand.u32 %v275, 4294901760
        %v472 = vsub.f32 %v275, %v471
        %v473 = vand.u32 %v472, 4294901760
        %v474 = vsub.f32 %v472, %v473
        %v475 = vand.u32 %v474, 4294901760
        %476 = vmatpush1.msra.mxu0 %v475
        %v477 = vand.u32 %v274, 4294901760
        %v478 = vsub.f32 %v274, %v477
        %v479 = vand.u32 %v478, 4294901760
        %v480 = vsub.f32 %v478, %v479
        %v481 = vand.u32 %v480, 4294901760
        %482 = vmatprep.subr.mxu0 %v481
        %v483 = vand.u32 %v273, 4294901760
        %v484 = vsub.f32 %v273, %v483
        %v485 = vand.u32 %v484, 4294901760
        %v486 = vsub.f32 %v484, %v485
        %v487 = vand.u32 %v486, 4294901760
        %488 = vmatpush1.msra.mxu0 %v487
        %v489 = vand.u32 %v272, 4294901760
        %v490 = vsub.f32 %v272, %v489
        %v491 = vand.u32 %v490, 4294901760
        %v492 = vsub.f32 %v490, %v491
        %v493 = vand.u32 %v492, 4294901760
        %494 = vmatprep.subr.mxu0 %v493
        %v495 = vand.u32 %v271, 4294901760
        %v496 = vsub.f32 %v271, %v495
        %v497 = vand.u32 %v496, 4294901760
        %v498 = vsub.f32 %v496, %v497
        %v499 = vand.u32 %v498, 4294901760
        %500 = vmatpush1.msra.mxu0 %v499
        %501 = vmatprep.subr.mxu0 0.0
        %502 = vmatpush2.msra.mxu0 0.0
        %503 = vmatprep.subr.mxu0 0.0
        %504 = vmatpush2.msra.mxu0 0.0
        %505 = vmatprep.subr.mxu0 0.0
        %506 = vmatpush2.msra.mxu0 0.0
        %507 = vmatprep.subr.mxu0 0.0
        %508 = vmatpush2.msra.mxu0 0.0
        %509 = vmatprep.subr.mxu0 0.0
        %510 = vmatpush2.msra.mxu0 0.0
        %511 = vmatprep.subr.mxu0 0.0
        %512 = vmatpush2.msra.mxu0 0.0
        %513 = vmatprep.subr.mxu0 0.0
        %514 = vmatpush2.msra.mxu0 0.0
        %515 = vmatprep.subr.mxu0 0.0
        %516 = vmatpush2.msra.mxu0 0.0
        %517 = vmatprep.subr.mxu0 0.0
        %518 = vmatpush2.msra.mxu0 0.0
        %519 = vmatprep.subr.mxu0 0.0
        %520 = vmatpush2.msra.mxu0 0.0
        %521 = vmatprep.subr.mxu0 0.0
        %522 = vmatpush2.msra.mxu0 0.0
        %523 = vmatprep.subr.mxu0 0.0
        %524 = vmatpush2.msra.mxu0 0.0
        %525 = vmatprep.subr.mxu0 0.0
        %526 = vmatpush2.msra.mxu0 0.0
        %527 = vmatprep.subr.mxu0 0.0
        %528 = vmatpush2.msra.mxu0 0.0
        %529 = vmatprep.subr.mxu0 0.0
        %530 = vmatpush2.msra.mxu0 0.0
        %531 = vmatprep.subr.mxu0 0.0
        %532 = vmatpush2.msra.mxu0 0.0
        %533 = vmatprep.mubr.f32.mxu0 0.0
        %v534 = vand.u32 %v304, 4294901760
        %535 = vmatmul.mubr.f32.gmra.mxu0 %v534
        %v536 = vpop.f32.mrf.mxu0
        %v537 = vadd.f32 %v392, %v536
        %v538 = vpop.f32.mrf.mxu0
        %v539 = vadd.f32 %v394, %v538
        %540 = vmatprep.mubr.f32.mxu0 0.0
        %v541 = vand.u32 %v306, 4294901760
        %542 = vmatmul.mubr.f32.gmra.mxu0 %v541
        %v543 = vpop.f32.mrf.mxu0
        %v544 = vadd.f32 %v403, %v543
        %v545 = vpop.f32.mrf.mxu0
        %v546 = vadd.f32 %v405, %v545
        %547 = vmatprep.mubr.f32.mxu0 0.0
        %v548 = vand.u32 %v308, 4294901760
        %549 = vmatmul.mubr.f32.gmra.mxu0 %v548
        %v550 = vpop.f32.mrf.mxu0
        %v551 = vadd.f32 %v414, %v550
        %v552 = vpop.f32.mrf.mxu0
        %v553 = vadd.f32 %v416, %v552
        %554 = vmatprep.mubr.f32.mxu0 0.0
        %v555 = vand.u32 %v310, 4294901760
        %556 = vmatmul.mubr.f32.gmra.mxu0 %v555
        %v557 = vpop.f32.mrf.mxu0
        %v558 = vadd.f32 %v425, %v557
        %v559 = vpop.f32.mrf.mxu0
        %v560 = vadd.f32 %v427, %v559
        %561 = vdwg.mxu0
        %562 = vmatprep.subr.mxu0 0.0
        %563 = vmatpush1.msra.mxu0 0.0
        %564 = vmatprep.subr.mxu0 0.0
        %565 = vmatpush1.msra.mxu0 0.0
        %566 = vmatprep.subr.mxu0 0.0
        %567 = vmatpush1.msra.mxu0 0.0
        %568 = vmatprep.subr.mxu0 0.0
        %569 = vmatpush1.msra.mxu0 0.0
        %570 = vmatprep.subr.mxu0 0.0
        %571 = vmatpush1.msra.mxu0 0.0
        %572 = vmatprep.subr.mxu0 0.0
        %573 = vmatpush1.msra.mxu0 0.0
        %574 = vmatprep.subr.mxu0 0.0
        %575 = vmatpush1.msra.mxu0 0.0
        %576 = vmatprep.subr.mxu0 0.0
        %577 = vmatpush1.msra.mxu0 0.0
        %578 = vmatprep.subr.mxu0 0.0
        %579 = vmatpush1.msra.mxu0 0.0
        %580 = vmatprep.subr.mxu0 0.0
        %581 = vmatpush1.msra.mxu0 0.0
        %582 = vmatprep.subr.mxu0 0.0
        %583 = vmatpush1.msra.mxu0 0.0
        %584 = vmatprep.subr.mxu0 0.0
        %585 = vmatpush1.msra.mxu0 0.0
        %v586 = vand.u32 %v278, 4294901760
        %v587 = vsub.f32 %v278, %v586
        %588 = vmatprep.subr.mxu0 %v587
        %v589 = vand.u32 %v277, 4294901760
        %v590 = vsub.f32 %v277, %v589
        %591 = vmatpush1.msra.mxu0 %v590
        %v592 = vand.u32 %v276, 4294901760
        %v593 = vsub.f32 %v276, %v592
        %594 = vmatprep.subr.mxu0 %v593
        %v595 = vand.u32 %v275, 4294901760
        %v596 = vsub.f32 %v275, %v595
        %597 = vmatpush1.msra.mxu0 %v596
        %v598 = vand.u32 %v274, 4294901760
        %v599 = vsub.f32 %v274, %v598
        %600 = vmatprep.subr.mxu0 %v599
        %v601 = vand.u32 %v273, 4294901760
        %v602 = vsub.f32 %v273, %v601
        %603 = vmatpush1.msra.mxu0 %v602
        %v604 = vand.u32 %v272, 4294901760
        %v605 = vsub.f32 %v272, %v604
        %606 = vmatprep.subr.mxu0 %v605
        %v607 = vand.u32 %v271, 4294901760
        %v608 = vsub.f32 %v271, %v607
        %609 = vmatpush1.msra.mxu0 %v608
        %610 = vmatprep.subr.mxu0 0.0
        %611 = vmatpush2.msra.mxu0 0.0
        %612 = vmatprep.subr.mxu0 0.0
        %613 = vmatpush2.msra.mxu0 0.0
        %614 = vmatprep.subr.mxu0 0.0
        %615 = vmatpush2.msra.mxu0 0.0
        %616 = vmatprep.subr.mxu0 0.0
        %617 = vmatpush2.msra.mxu0 0.0
        %618 = vmatprep.subr.mxu0 0.0
        %619 = vmatpush2.msra.mxu0 0.0
        %620 = vmatprep.subr.mxu0 0.0
        %621 = vmatpush2.msra.mxu0 0.0
        %622 = vmatprep.subr.mxu0 0.0
        %623 = vmatpush2.msra.mxu0 0.0
        %624 = vmatprep.subr.mxu0 0.0
        %625 = vmatpush2.msra.mxu0 0.0
        %626 = vmatprep.subr.mxu0 0.0
        %627 = vmatpush2.msra.mxu0 0.0
        %628 = vmatprep.subr.mxu0 0.0
        %629 = vmatpush2.msra.mxu0 0.0
        %630 = vmatprep.subr.mxu0 0.0
        %631 = vmatpush2.msra.mxu0 0.0
        %632 = vmatprep.subr.mxu0 0.0
        %633 = vmatpush2.msra.mxu0 0.0
        %634 = vmatprep.subr.mxu0 0.0
        %635 = vmatpush2.msra.mxu0 0.0
        %636 = vmatprep.subr.mxu0 0.0
        %637 = vmatpush2.msra.mxu0 0.0
        %638 = vmatprep.subr.mxu0 0.0
        %639 = vmatpush2.msra.mxu0 0.0
        %640 = vmatprep.subr.mxu0 0.0
        %641 = vmatpush2.msra.mxu0 0.0
        %642 = vmatprep.mubr.f32.mxu0 0.0
        %v643 = vand.u32 %v304, 4294901760
        %v644 = vsub.f32 %v304, %v643
        %645 = vmatmul.mubr.f32.gmra.mxu0 %v644
        %v646 = vpop.f32.mrf.mxu0
        %v647 = vadd.f32 %v537, %v646
        %v648 = vpop.f32.mrf.mxu0
        %v649 = vadd.f32 %v539, %v648
        %650 = vmatprep.mubr.f32.mxu0 0.0
        %v651 = vand.u32 %v306, 4294901760
        %v652 = vsub.f32 %v306, %v651
        %653 = vmatmul.mubr.f32.gmra.mxu0 %v652
        %v654 = vpop.f32.mrf.mxu0
        %v655 = vadd.f32 %v544, %v654
        %v656 = vpop.f32.mrf.mxu0
        %v657 = vadd.f32 %v546, %v656
        %658 = vmatprep.mubr.f32.mxu0 0.0
        %v659 = vand.u32 %v308, 4294901760
        %v660 = vsub.f32 %v308, %v659
        %661 = vmatmul.mubr.f32.gmra.mxu0 %v660
        %v662 = vpop.f32.mrf.mxu0
        %v663 = vadd.f32 %v551, %v662
        %v664 = vpop.f32.mrf.mxu0
        %v665 = vadd.f32 %v553, %v664
        %666 = vmatprep.mubr.f32.mxu0 0.0
        %v667 = vand.u32 %v310, 4294901760
        %v668 = vsub.f32 %v310, %v667
        %669 = vmatmul.mubr.f32.gmra.mxu0 %v668
        %v670 = vpop.f32.mrf.mxu0
        %v671 = vadd.f32 %v558, %v670
        %v672 = vpop.f32.mrf.mxu0
        %v673 = vadd.f32 %v560, %v672
        %674 = vdwg.mxu0
        %675 = vmatprep.subr.mxu0 0.0
        %676 = vmatpush1.msra.mxu0 0.0
        %677 = vmatprep.subr.mxu0 0.0
        %678 = vmatpush1.msra.mxu0 0.0
        %679 = vmatprep.subr.mxu0 0.0
        %680 = vmatpush1.msra.mxu0 0.0
        %681 = vmatprep.subr.mxu0 0.0
        %682 = vmatpush1.msra.mxu0 0.0
        %683 = vmatprep.subr.mxu0 0.0
        %684 = vmatpush1.msra.mxu0 0.0
        %685 = vmatprep.subr.mxu0 0.0
        %686 = vmatpush1.msra.mxu0 0.0
        %687 = vmatprep.subr.mxu0 0.0
        %688 = vmatpush1.msra.mxu0 0.0
        %689 = vmatprep.subr.mxu0 0.0
        %690 = vmatpush1.msra.mxu0 0.0
        %691 = vmatprep.subr.mxu0 0.0
        %692 = vmatpush1.msra.mxu0 0.0
        %693 = vmatprep.subr.mxu0 0.0
        %694 = vmatpush1.msra.mxu0 0.0
        %695 = vmatprep.subr.mxu0 0.0
        %696 = vmatpush1.msra.mxu0 0.0
        %697 = vmatprep.subr.mxu0 0.0
        %698 = vmatpush1.msra.mxu0 0.0
        %v699 = vand.u32 %v278, 4294901760
        %700 = vmatprep.subr.mxu0 %v699
        %v701 = vand.u32 %v277, 4294901760
        %702 = vmatpush1.msra.mxu0 %v701
        %v703 = vand.u32 %v276, 4294901760
        %704 = vmatprep.subr.mxu0 %v703
        %v705 = vand.u32 %v275, 4294901760
        %706 = vmatpush1.msra.mxu0 %v705
        %v707 = vand.u32 %v274, 4294901760
        %708 = vmatprep.subr.mxu0 %v707
        %v709 = vand.u32 %v273, 4294901760
        %710 = vmatpush1.msra.mxu0 %v709
        %v711 = vand.u32 %v272, 4294901760
        %712 = vmatprep.subr.mxu0 %v711
        %v713 = vand.u32 %v271, 4294901760
        %714 = vmatpush1.msra.mxu0 %v713
        %715 = vmatprep.subr.mxu0 0.0
        %716 = vmatpush2.msra.mxu0 0.0
        %717 = vmatprep.subr.mxu0 0.0
        %718 = vmatpush2.msra.mxu0 0.0
        %719 = vmatprep.subr.mxu0 0.0
        %720 = vmatpush2.msra.mxu0 0.0
        %721 = vmatprep.subr.mxu0 0.0
        %722 = vmatpush2.msra.mxu0 0.0
        %723 = vmatprep.subr.mxu0 0.0
        %724 = vmatpush2.msra.mxu0 0.0
        %725 = vmatprep.subr.mxu0 0.0
        %726 = vmatpush2.msra.mxu0 0.0
        %727 = vmatprep.subr.mxu0 0.0
        %728 = vmatpush2.msra.mxu0 0.0
        %729 = vmatprep.subr.mxu0 0.0
        %730 = vmatpush2.msra.mxu0 0.0
        %731 = vmatprep.subr.mxu0 0.0
        %732 = vmatpush2.msra.mxu0 0.0
        %733 = vmatprep.subr.mxu0 0.0
        %734 = vmatpush2.msra.mxu0 0.0
        %735 = vmatprep.subr.mxu0 0.0
        %736 = vmatpush2.msra.mxu0 0.0
        %737 = vmatprep.subr.mxu0 0.0
        %738 = vmatpush2.msra.mxu0 0.0
        %739 = vmatprep.subr.mxu0 0.0
        %740 = vmatpush2.msra.mxu0 0.0
        %741 = vmatprep.subr.mxu0 0.0
        %742 = vmatpush2.msra.mxu0 0.0
        %743 = vmatprep.subr.mxu0 0.0
        %744 = vmatpush2.msra.mxu0 0.0
        %745 = vmatprep.subr.mxu0 0.0
        %746 = vmatpush2.msra.mxu0 0.0
        %747 = vmatprep.mubr.f32.mxu0 0.0
        %v748 = vand.u32 %v304, 4294901760
        %v749 = vsub.f32 %v304, %v748
        %v750 = vand.u32 %v749, 4294901760
        %751 = vmatmul.mubr.f32.gmra.mxu0 %v750
        %v752 = vpop.f32.mrf.mxu0
        %v753 = vadd.f32 %v647, %v752
        %v754 = vpop.f32.mrf.mxu0
        %v755 = vadd.f32 %v649, %v754
        %756 = vmatprep.mubr.f32.mxu0 0.0
        %v757 = vand.u32 %v306, 4294901760
        %v758 = vsub.f32 %v306, %v757
        %v759 = vand.u32 %v758, 4294901760
        %760 = vmatmul.mubr.f32.gmra.mxu0 %v759
        %v761 = vpop.f32.mrf.mxu0
        %v762 = vadd.f32 %v655, %v761
        %v763 = vpop.f32.mrf.mxu0
        %v764 = vadd.f32 %v657, %v763
        %765 = vmatprep.mubr.f32.mxu0 0.0
        %v766 = vand.u32 %v308, 4294901760
        %v767 = vsub.f32 %v308, %v766
        %v768 = vand.u32 %v767, 4294901760
        %769 = vmatmul.mubr.f32.gmra.mxu0 %v768
        %v770 = vpop.f32.mrf.mxu0
        %v771 = vadd.f32 %v663, %v770
        %v772 = vpop.f32.mrf.mxu0
        %v773 = vadd.f32 %v665, %v772
        %774 = vmatprep.mubr.f32.mxu0 0.0
        %v775 = vand.u32 %v310, 4294901760
        %v776 = vsub.f32 %v310, %v775
        %v777 = vand.u32 %v776, 4294901760
        %778 = vmatmul.mubr.f32.gmra.mxu0 %v777
        %v779 = vpop.f32.mrf.mxu0
        %v780 = vadd.f32 %v671, %v779
        %v781 = vpop.f32.mrf.mxu0
        %v782 = vadd.f32 %v673, %v781
        %783 = vdwg.mxu0
        %784 = vmatprep.subr.mxu0 0.0
        %785 = vmatpush1.msra.mxu0 0.0
        %786 = vmatprep.subr.mxu0 0.0
        %787 = vmatpush1.msra.mxu0 0.0
        %788 = vmatprep.subr.mxu0 0.0
        %789 = vmatpush1.msra.mxu0 0.0
        %790 = vmatprep.subr.mxu0 0.0
        %791 = vmatpush1.msra.mxu0 0.0
        %792 = vmatprep.subr.mxu0 0.0
        %793 = vmatpush1.msra.mxu0 0.0
        %794 = vmatprep.subr.mxu0 0.0
        %795 = vmatpush1.msra.mxu0 0.0
        %796 = vmatprep.subr.mxu0 0.0
        %797 = vmatpush1.msra.mxu0 0.0
        %798 = vmatprep.subr.mxu0 0.0
        %799 = vmatpush1.msra.mxu0 0.0
        %800 = vmatprep.subr.mxu0 0.0
        %801 = vmatpush1.msra.mxu0 0.0
        %802 = vmatprep.subr.mxu0 0.0
        %803 = vmatpush1.msra.mxu0 0.0
        %804 = vmatprep.subr.mxu0 0.0
        %805 = vmatpush1.msra.mxu0 0.0
        %806 = vmatprep.subr.mxu0 0.0
        %807 = vmatpush1.msra.mxu0 0.0
        %v808 = vand.u32 %v278, 4294901760
        %v809 = vsub.f32 %v278, %v808
        %v810 = vand.u32 %v809, 4294901760
        %811 = vmatprep.subr.mxu0 %v810
        %v812 = vand.u32 %v277, 4294901760
        %v813 = vsub.f32 %v277, %v812
        %v814 = vand.u32 %v813, 4294901760
        %815 = vmatpush1.msra.mxu0 %v814
        %v816 = vand.u32 %v276, 4294901760
        %v817 = vsub.f32 %v276, %v816
        %v818 = vand.u32 %v817, 4294901760
        %819 = vmatprep.subr.mxu0 %v818
        %v820 = vand.u32 %v275, 4294901760
        %v821 = vsub.f32 %v275, %v820
        %v822 = vand.u32 %v821, 4294901760
        %823 = vmatpush1.msra.mxu0 %v822
        %v824 = vand.u32 %v274, 4294901760
        %v825 = vsub.f32 %v274, %v824
        %v826 = vand.u32 %v825, 4294901760
        %827 = vmatprep.subr.mxu0 %v826
        %v828 = vand.u32 %v273, 4294901760
        %v829 = vsub.f32 %v273, %v828
        %v830 = vand.u32 %v829, 4294901760
        %831 = vmatpush1.msra.mxu0 %v830
        %v832 = vand.u32 %v272, 4294901760
        %v833 = vsub.f32 %v272, %v832
        %v834 = vand.u32 %v833, 4294901760
        %835 = vmatprep.subr.mxu0 %v834
        %v836 = vand.u32 %v271, 4294901760
        %v837 = vsub.f32 %v271, %v836
        %v838 = vand.u32 %v837, 4294901760
        %839 = vmatpush1.msra.mxu0 %v838
        %840 = vmatprep.subr.mxu0 0.0
        %841 = vmatpush2.msra.mxu0 0.0
        %842 = vmatprep.subr.mxu0 0.0
        %843 = vmatpush2.msra.mxu0 0.0
        %844 = vmatprep.subr.mxu0 0.0
        %845 = vmatpush2.msra.mxu0 0.0
        %846 = vmatprep.subr.mxu0 0.0
        %847 = vmatpush2.msra.mxu0 0.0
        %848 = vmatprep.subr.mxu0 0.0
        %849 = vmatpush2.msra.mxu0 0.0
        %850 = vmatprep.subr.mxu0 0.0
        %851 = vmatpush2.msra.mxu0 0.0
        %852 = vmatprep.subr.mxu0 0.0
        %853 = vmatpush2.msra.mxu0 0.0
        %854 = vmatprep.subr.mxu0 0.0
        %855 = vmatpush2.msra.mxu0 0.0
        %856 = vmatprep.subr.mxu0 0.0
        %857 = vmatpush2.msra.mxu0 0.0
        %858 = vmatprep.subr.mxu0 0.0
        %859 = vmatpush2.msra.mxu0 0.0
        %860 = vmatprep.subr.mxu0 0.0
        %861 = vmatpush2.msra.mxu0 0.0
        %862 = vmatprep.subr.mxu0 0.0
        %863 = vmatpush2.msra.mxu0 0.0
        %864 = vmatprep.subr.mxu0 0.0
        %865 = vmatpush2.msra.mxu0 0.0
        %866 = vmatprep.subr.mxu0 0.0
        %867 = vmatpush2.msra.mxu0 0.0
        %868 = vmatprep.subr.mxu0 0.0
        %869 = vmatpush2.msra.mxu0 0.0
        %870 = vmatprep.subr.mxu0 0.0
        %871 = vmatpush2.msra.mxu0 0.0
        %872 = vmatprep.mubr.f32.mxu0 0.0
        %v873 = vand.u32 %v304, 4294901760
        %874 = vmatmul.mubr.f32.gmra.mxu0 %v873
        %v875 = vpop.f32.mrf.mxu0
        %v876 = vadd.f32 %v753, %v875
        %v877 = vpop.f32.mrf.mxu0
        %v878 = vadd.f32 %v755, %v877
        %879 = vmatprep.mubr.f32.mxu0 0.0
        %v880 = vand.u32 %v306, 4294901760
        %881 = vmatmul.mubr.f32.gmra.mxu0 %v880
        %v882 = vpop.f32.mrf.mxu0
        %v883 = vadd.f32 %v762, %v882
        %v884 = vpop.f32.mrf.mxu0
        %v885 = vadd.f32 %v764, %v884
        %886 = vmatprep.mubr.f32.mxu0 0.0
        %v887 = vand.u32 %v308, 4294901760
        %888 = vmatmul.mubr.f32.gmra.mxu0 %v887
        %v889 = vpop.f32.mrf.mxu0
        %v890 = vadd.f32 %v771, %v889
        %v891 = vpop.f32.mrf.mxu0
        %v892 = vadd.f32 %v773, %v891
        %893 = vmatprep.mubr.f32.mxu0 0.0
        %v894 = vand.u32 %v310, 4294901760
        %895 = vmatmul.mubr.f32.gmra.mxu0 %v894
        %v896 = vpop.f32.mrf.mxu0
        %v897 = vadd.f32 %v780, %v896
        %v898 = vpop.f32.mrf.mxu0
        %v899 = vadd.f32 %v782, %v898
        %900 = vdwg.mxu0
        %901 = vmatprep.subr.mxu0 0.0
        %902 = vmatpush1.msra.mxu0 0.0
        %903 = vmatprep.subr.mxu0 0.0
        %904 = vmatpush1.msra.mxu0 0.0
        %905 = vmatprep.subr.mxu0 0.0
        %906 = vmatpush1.msra.mxu0 0.0
        %907 = vmatprep.subr.mxu0 0.0
        %908 = vmatpush1.msra.mxu0 0.0
        %909 = vmatprep.subr.mxu0 0.0
        %910 = vmatpush1.msra.mxu0 0.0
        %911 = vmatprep.subr.mxu0 0.0
        %912 = vmatpush1.msra.mxu0 0.0
        %913 = vmatprep.subr.mxu0 0.0
        %914 = vmatpush1.msra.mxu0 0.0
        %915 = vmatprep.subr.mxu0 0.0
        %916 = vmatpush1.msra.mxu0 0.0
        %917 = vmatprep.subr.mxu0 0.0
        %918 = vmatpush1.msra.mxu0 0.0
        %919 = vmatprep.subr.mxu0 0.0
        %920 = vmatpush1.msra.mxu0 0.0
        %921 = vmatprep.subr.mxu0 0.0
        %922 = vmatpush1.msra.mxu0 0.0
        %923 = vmatprep.subr.mxu0 0.0
        %924 = vmatpush1.msra.mxu0 0.0
        %v925 = vand.u32 %v278, 4294901760
        %926 = vmatprep.subr.mxu0 %v925
        %v927 = vand.u32 %v277, 4294901760
        %928 = vmatpush1.msra.mxu0 %v927
        %v929 = vand.u32 %v276, 4294901760
        %930 = vmatprep.subr.mxu0 %v929
        %v931 = vand.u32 %v275, 4294901760
        %932 = vmatpush1.msra.mxu0 %v931
        %v933 = vand.u32 %v274, 4294901760
        %934 = vmatprep.subr.mxu0 %v933
        %v935 = vand.u32 %v273, 4294901760
        %936 = vmatpush1.msra.mxu0 %v935
        %v937 = vand.u32 %v272, 4294901760
        %938 = vmatprep.subr.mxu0 %v937
        %v939 = vand.u32 %v271, 4294901760
        %940 = vmatpush1.msra.mxu0 %v939
        %941 = vmatprep.subr.mxu0 0.0
        %942 = vmatpush2.msra.mxu0 0.0
        %943 = vmatprep.subr.mxu0 0.0
        %944 = vmatpush2.msra.mxu0 0.0
        %945 = vmatprep.subr.mxu0 0.0
        %946 = vmatpush2.msra.mxu0 0.0
        %947 = vmatprep.subr.mxu0 0.0
        %948 = vmatpush2.msra.mxu0 0.0
        %949 = vmatprep.subr.mxu0 0.0
        %950 = vmatpush2.msra.mxu0 0.0
        %951 = vmatprep.subr.mxu0 0.0
        %952 = vmatpush2.msra.mxu0 0.0
        %953 = vmatprep.subr.mxu0 0.0
        %954 = vmatpush2.msra.mxu0 0.0
        %955 = vmatprep.subr.mxu0 0.0
        %956 = vmatpush2.msra.mxu0 0.0
        %957 = vmatprep.subr.mxu0 0.0
        %958 = vmatpush2.msra.mxu0 0.0
        %959 = vmatprep.subr.mxu0 0.0
        %960 = vmatpush2.msra.mxu0 0.0
        %961 = vmatprep.subr.mxu0 0.0
        %962 = vmatpush2.msra.mxu0 0.0
        %963 = vmatprep.subr.mxu0 0.0
        %964 = vmatpush2.msra.mxu0 0.0
        %965 = vmatprep.subr.mxu0 0.0
        %966 = vmatpush2.msra.mxu0 0.0
        %967 = vmatprep.subr.mxu0 0.0
        %968 = vmatpush2.msra.mxu0 0.0
        %969 = vmatprep.subr.mxu0 0.0
        %970 = vmatpush2.msra.mxu0 0.0
        %971 = vmatprep.subr.mxu0 0.0
        %972 = vmatpush2.msra.mxu0 0.0
        %973 = vmatprep.mubr.f32.mxu0 0.0
        %v974 = vand.u32 %v304, 4294901760
        %975 = vmatmul.mubr.f32.gmra.mxu0 %v974
        %v976 = vpop.f32.mrf.mxu0
        %v977 = vadd.f32 %v876, %v976
        %v978 = vpop.f32.mrf.mxu0
        %v979 = vadd.f32 %v878, %v978
        %980 = vmatprep.mubr.f32.mxu0 0.0
        %v981 = vand.u32 %v306, 4294901760
        %982 = vmatmul.mubr.f32.gmra.mxu0 %v981
        %v983 = vpop.f32.mrf.mxu0
        %v984 = vadd.f32 %v883, %v983
        %v985 = vpop.f32.mrf.mxu0
        %v986 = vadd.f32 %v885, %v985
        %987 = vmatprep.mubr.f32.mxu0 0.0
        %v988 = vand.u32 %v308, 4294901760
        %989 = vmatmul.mubr.f32.gmra.mxu0 %v988
        %v990 = vpop.f32.mrf.mxu0
        %v991 = vadd.f32 %v890, %v990
        %v992 = vpop.f32.mrf.mxu0
        %v993 = vadd.f32 %v892, %v992
        %994 = vmatprep.mubr.f32.mxu0 0.0
        %v995 = vand.u32 %v310, 4294901760
        %996 = vmatmul.mubr.f32.gmra.mxu0 %v995
        %v997 = vpop.f32.mrf.mxu0
        %v998 = vadd.f32 %v897, %v997
        %v999 = vpop.f32.mrf.mxu0
        %v1000 = vadd.f32 %v899, %v999
        %1001 = vdwg.mxu0
        %v1002 = vtanh.pop %v977
        %v1003 = vtanh.pop %v979
        %v1004 = vtanh.pop %v984
        %v1005 = vtanh.pop %v986
        %v1006 = vtanh.pop %v991
        %v1007 = vtanh.pop %v993
        %v1008 = vtanh.pop %v998
        %v1009 = vtanh.pop %v1000
        %v1010 = vld [vmem:[%s1 + $0x40] sm:$0xff]
        %v1011 = vld [vmem:[%s1 + $0x48] sm:$0xff]
        %v1012 = vld [vmem:[%s1 + $0x50] sm:$0xff]
        %v1013 = vld [vmem:[%s1 + $0x58] sm:$0xff]
        %1015 = vset.pattern.permute.xlu0 32
        %1016 = vperm.xlu0 %1015, %v1010
        %v1017 = vpop.permute.xlu0 %1016
        %1020 = vset.pattern.permute.xlu0 32
        %1021 = vperm.xlu0 %1020, %v1011
        %v1022 = vpop.permute.xlu0 %1021
        %1025 = vset.pattern.permute.xlu0 32
        %1026 = vperm.xlu0 %1025, %v1012
        %v1027 = vpop.permute.xlu0 %1026
        %1030 = vset.pattern.permute.xlu0 32
        %1031 = vperm.xlu0 %1030, %v1013
        %v1032 = vpop.permute.xlu0 %1031
        %v1034 = vsel %vm303, %v1010, 0
        %v1036 = vsel %vm303, %v1011, 0
        %v1038 = vsel %vm303, %v1012, 0
        %v1040 = vsel %vm303, %v1013, 0
        %1042 = vmatprep.subr.mxu0 0.0
        %1043 = vmatpush1.msra.mxu0 0.0
        %1044 = vmatprep.subr.mxu0 0.0
        %1045 = vmatpush1.msra.mxu0 0.0
        %1046 = vmatprep.subr.mxu0 0.0
        %1047 = vmatpush1.msra.mxu0 0.0
        %1048 = vmatprep.subr.mxu0 0.0
        %1049 = vmatpush1.msra.mxu0 0.0
        %1050 = vmatprep.subr.mxu0 0.0
        %1051 = vmatpush1.msra.mxu0 0.0
        %1052 = vmatprep.subr.mxu0 0.0
        %1053 = vmatpush1.msra.mxu0 0.0
        %1054 = vmatprep.subr.mxu0 0.0
        %1055 = vmatpush1.msra.mxu0 0.0
        %1056 = vmatprep.subr.mxu0 0.0
        %1057 = vmatpush1.msra.mxu0 0.0
        %1058 = vmatprep.subr.mxu0 0.0
        %1059 = vmatpush1.msra.mxu0 0.0
        %1060 = vmatprep.subr.mxu0 0.0
        %1061 = vmatpush1.msra.mxu0 0.0
        %1062 = vmatprep.subr.mxu0 0.0
        %1063 = vmatpush1.msra.mxu0 0.0
        %1064 = vmatprep.subr.mxu0 0.0
        %1065 = vmatpush1.msra.mxu0 0.0
        %v1066 = vand.u32 %v1009, 4294901760
        %1067 = vmatprep.subr.mxu0 %v1066
        %v1068 = vand.u32 %v1008, 4294901760
        %1069 = vmatpush1.msra.mxu0 %v1068
        %v1070 = vand.u32 %v1007, 4294901760
        %1071 = vmatprep.subr.mxu0 %v1070
        %v1072 = vand.u32 %v1006, 4294901760
        %1073 = vmatpush1.msra.mxu0 %v1072
        %v1074 = vand.u32 %v1005, 4294901760
        %1075 = vmatprep.subr.mxu0 %v1074
        %v1076 = vand.u32 %v1004, 4294901760
        %1077 = vmatpush1.msra.mxu0 %v1076
        %v1078 = vand.u32 %v1003, 4294901760
        %1079 = vmatprep.subr.mxu0 %v1078
        %v1080 = vand.u32 %v1002, 4294901760
        %1081 = vmatpush1.msra.mxu0 %v1080
        %1082 = vmatprep.subr.mxu0 0.0
        %1083 = vmatpush2.msra.mxu0 0.0
        %1084 = vmatprep.subr.mxu0 0.0
        %1085 = vmatpush2.msra.mxu0 0.0
        %1086 = vmatprep.subr.mxu0 0.0
        %1087 = vmatpush2.msra.mxu0 0.0
        %1088 = vmatprep.subr.mxu0 0.0
        %1089 = vmatpush2.msra.mxu0 0.0
        %1090 = vmatprep.subr.mxu0 0.0
        %1091 = vmatpush2.msra.mxu0 0.0
        %1092 = vmatprep.subr.mxu0 0.0
        %1093 = vmatpush2.msra.mxu0 0.0
        %1094 = vmatprep.subr.mxu0 0.0
        %1095 = vmatpush2.msra.mxu0 0.0
        %1096 = vmatprep.subr.mxu0 0.0
        %1097 = vmatpush2.msra.mxu0 0.0
        %1098 = vmatprep.subr.mxu0 0.0
        %1099 = vmatpush2.msra.mxu0 0.0
        %1100 = vmatprep.subr.mxu0 0.0
        %1101 = vmatpush2.msra.mxu0 0.0
        %1102 = vmatprep.subr.mxu0 0.0
        %1103 = vmatpush2.msra.mxu0 0.0
        %1104 = vmatprep.subr.mxu0 0.0
        %1105 = vmatpush2.msra.mxu0 0.0
        %1106 = vmatprep.subr.mxu0 0.0
        %1107 = vmatpush2.msra.mxu0 0.0
        %1108 = vmatprep.subr.mxu0 0.0
        %1109 = vmatpush2.msra.mxu0 0.0
        %1110 = vmatprep.subr.mxu0 0.0
        %1111 = vmatpush2.msra.mxu0 0.0
        %1112 = vmatprep.subr.mxu0 0.0
        %1113 = vmatpush2.msra.mxu0 0.0
        %1114 = vmatprep.mubr.f32.mxu0 0.0
        %v1115 = vand.u32 %v1034, 4294901760
        %v1116 = vsub.f32 %v1034, %v1115
        %v1117 = vand.u32 %v1116, 4294901760
        %v1118 = vsub.f32 %v1116, %v1117
        %v1119 = vand.u32 %v1118, 4294901760
        %1120 = vmatmul.mubr.f32.gmra.mxu0 %v1119
        %v1121 = vpop.f32.mrf.mxu0
        %v1122 = vadd.f32 %v1017, %v1121
        %v1123 = vpop.f32.mrf.mxu0
        %v1124 = vadd.f32 %v1017, %v1123
        %1125 = vmatprep.mubr.f32.mxu0 0.0
        %v1126 = vand.u32 %v1036, 4294901760
        %v1127 = vsub.f32 %v1036, %v1126
        %v1128 = vand.u32 %v1127, 4294901760
        %v1129 = vsub.f32 %v1127, %v1128
        %v1130 = vand.u32 %v1129, 4294901760
        %1131 = vmatmul.mubr.f32.gmra.mxu0 %v1130
        %v1132 = vpop.f32.mrf.mxu0
        %v1133 = vadd.f32 %v1022, %v1132
        %v1134 = vpop.f32.mrf.mxu0
        %v1135 = vadd.f32 %v1022, %v1134
        %1136 = vmatprep.mubr.f32.mxu0 0.0
        %v1137 = vand.u32 %v1038, 4294901760
        %v1138 = vsub.f32 %v1038, %v1137
        %v1139 = vand.u32 %v1138, 4294901760
        %v1140 = vsub.f32 %v1138, %v1139
        %v1141 = vand.u32 %v1140, 4294901760
        %1142 = vmatmul.mubr.f32.gmra.mxu0 %v1141
        %v1143 = vpop.f32.mrf.mxu0
        %v1144 = vadd.f32 %v1027, %v1143
        %v1145 = vpop.f32.mrf.mxu0
        %v1146 = vadd.f32 %v1027, %v1145
        %1147 = vmatprep.mubr.f32.mxu0 0.0
        %v1148 = vand.u32 %v1040, 4294901760
        %v1149 = vsub.f32 %v1040, %v1148
        %v1150 = vand.u32 %v1149, 4294901760
        %v1151 = vsub.f32 %v1149, %v1150
        %v1152 = vand.u32 %v1151, 4294901760
        %1153 = vmatmul.mubr.f32.gmra.mxu0 %v1152
        %v1154 = vpop.f32.mrf.mxu0
        %v1155 = vadd.f32 %v1032, %v1154
        %v1156 = vpop.f32.mrf.mxu0
        %v1157 = vadd.f32 %v1032, %v1156
        %1158 = vdwg.mxu0
        %1159 = vmatprep.subr.mxu0 0.0
        %1160 = vmatpush1.msra.mxu0 0.0
        %1161 = vmatprep.subr.mxu0 0.0
        %1162 = vmatpush1.msra.mxu0 0.0
        %1163 = vmatprep.subr.mxu0 0.0
        %1164 = vmatpush1.msra.mxu0 0.0
        %1165 = vmatprep.subr.mxu0 0.0
        %1166 = vmatpush1.msra.mxu0 0.0
        %1167 = vmatprep.subr.mxu0 0.0
        %1168 = vmatpush1.msra.mxu0 0.0
        %1169 = vmatprep.subr.mxu0 0.0
        %1170 = vmatpush1.msra.mxu0 0.0
        %1171 = vmatprep.subr.mxu0 0.0
        %1172 = vmatpush1.msra.mxu0 0.0
        %1173 = vmatprep.subr.mxu0 0.0
        %1174 = vmatpush1.msra.mxu0 0.0
        %1175 = vmatprep.subr.mxu0 0.0
        %1176 = vmatpush1.msra.mxu0 0.0
        %1177 = vmatprep.subr.mxu0 0.0
        %1178 = vmatpush1.msra.mxu0 0.0
        %1179 = vmatprep.subr.mxu0 0.0
        %1180 = vmatpush1.msra.mxu0 0.0
        %1181 = vmatprep.subr.mxu0 0.0
        %1182 = vmatpush1.msra.mxu0 0.0
        %v1183 = vand.u32 %v1009, 4294901760
        %v1184 = vsub.f32 %v1009, %v1183
        %v1185 = vand.u32 %v1184, 4294901760
        %v1186 = vsub.f32 %v1184, %v1185
        %v1187 = vand.u32 %v1186, 4294901760
        %1188 = vmatprep.subr.mxu0 %v1187
        %v1189 = vand.u32 %v1008, 4294901760
        %v1190 = vsub.f32 %v1008, %v1189
        %v1191 = vand.u32 %v1190, 4294901760
        %v1192 = vsub.f32 %v1190, %v1191
        %v1193 = vand.u32 %v1192, 4294901760
        %1194 = vmatpush1.msra.mxu0 %v1193
        %v1195 = vand.u32 %v1007, 4294901760
        %v1196 = vsub.f32 %v1007, %v1195
        %v1197 = vand.u32 %v1196, 4294901760
        %v1198 = vsub.f32 %v1196, %v1197
        %v1199 = vand.u32 %v1198, 4294901760
        %1200 = vmatprep.subr.mxu0 %v1199
        %v1201 = vand.u32 %v1006, 4294901760
        %v1202 = vsub.f32 %v1006, %v1201
        %v1203 = vand.u32 %v1202, 4294901760
        %v1204 = vsub.f32 %v1202, %v1203
        %v1205 = vand.u32 %v1204, 4294901760
        %1206 = vmatpush1.msra.mxu0 %v1205
        %v1207 = vand.u32 %v1005, 4294901760
        %v1208 = vsub.f32 %v1005, %v1207
        %v1209 = vand.u32 %v1208, 4294901760
        %v1210 = vsub.f32 %v1208, %v1209
        %v1211 = vand.u32 %v1210, 4294901760
        %1212 = vmatprep.subr.mxu0 %v1211
        %v1213 = vand.u32 %v1004, 4294901760
        %v1214 = vsub.f32 %v1004, %v1213
        %v1215 = vand.u32 %v1214, 4294901760
        %v1216 = vsub.f32 %v1214, %v1215
        %v1217 = vand.u32 %v1216, 4294901760
        %1218 = vmatpush1.msra.mxu0 %v1217
        %v1219 = vand.u32 %v1003, 4294901760
        %v1220 = vsub.f32 %v1003, %v1219
        %v1221 = vand.u32 %v1220, 4294901760
        %v1222 = vsub.f32 %v1220, %v1221
        %v1223 = vand.u32 %v1222, 4294901760
        %1224 = vmatprep.subr.mxu0 %v1223
        %v1225 = vand.u32 %v1002, 4294901760
        %v1226 = vsub.f32 %v1002, %v1225
        %v1227 = vand.u32 %v1226, 4294901760
        %v1228 = vsub.f32 %v1226, %v1227
        %v1229 = vand.u32 %v1228, 4294901760
        %1230 = vmatpush1.msra.mxu0 %v1229
        %1231 = vmatprep.subr.mxu0 0.0
        %1232 = vmatpush2.msra.mxu0 0.0
        %1233 = vmatprep.subr.mxu0 0.0
        %1234 = vmatpush2.msra.mxu0 0.0
        %1235 = vmatprep.subr.mxu0 0.0
        %1236 = vmatpush2.msra.mxu0 0.0
        %1237 = vmatprep.subr.mxu0 0.0
        %1238 = vmatpush2.msra.mxu0 0.0
        %1239 = vmatprep.subr.mxu0 0.0
        %1240 = vmatpush2.msra.mxu0 0.0
        %1241 = vmatprep.subr.mxu0 0.0
        %1242 = vmatpush2.msra.mxu0 0.0
        %1243 = vmatprep.subr.mxu0 0.0
        %1244 = vmatpush2.msra.mxu0 0.0
        %1245 = vmatprep.subr.mxu0 0.0
        %1246 = vmatpush2.msra.mxu0 0.0
        %1247 = vmatprep.subr.mxu0 0.0
        %1248 = vmatpush2.msra.mxu0 0.0
        %1249 = vmatprep.subr.mxu0 0.0
        %1250 = vmatpush2.msra.mxu0 0.0
        %1251 = vmatprep.subr.mxu0 0.0
        %1252 = vmatpush2.msra.mxu0 0.0
        %1253 = vmatprep.subr.mxu0 0.0
        %1254 = vmatpush2.msra.mxu0 0.0
        %1255 = vmatprep.subr.mxu0 0.0
        %1256 = vmatpush2.msra.mxu0 0.0
        %1257 = vmatprep.subr.mxu0 0.0
        %1258 = vmatpush2.msra.mxu0 0.0
        %1259 = vmatprep.subr.mxu0 0.0
        %1260 = vmatpush2.msra.mxu0 0.0
        %1261 = vmatprep.subr.mxu0 0.0
        %1262 = vmatpush2.msra.mxu0 0.0
        %1263 = vmatprep.mubr.f32.mxu0 0.0
        %v1264 = vand.u32 %v1034, 4294901760
        %1265 = vmatmul.mubr.f32.gmra.mxu0 %v1264
        %v1266 = vpop.f32.mrf.mxu0
        %v1267 = vadd.f32 %v1122, %v1266
        %v1268 = vpop.f32.mrf.mxu0
        %v1269 = vadd.f32 %v1124, %v1268
        %1270 = vmatprep.mubr.f32.mxu0 0.0
        %v1271 = vand.u32 %v1036, 4294901760
        %1272 = vmatmul.mubr.f32.gmra.mxu0 %v1271
        %v1273 = vpop.f32.mrf.mxu0
        %v1274 = vadd.f32 %v1133, %v1273
        %v1275 = vpop.f32.mrf.mxu0
        %v1276 = vadd.f32 %v1135, %v1275
        %1277 = vmatprep.mubr.f32.mxu0 0.0
        %v1278 = vand.u32 %v1038, 4294901760
        %1279 = vmatmul.mubr.f32.gmra.mxu0 %v1278
        %v1280 = vpop.f32.mrf.mxu0
        %v1281 = vadd.f32 %v1144, %v1280
        %v1282 = vpop.f32.mrf.mxu0
        %v1283 = vadd.f32 %v1146, %v1282
        %1284 = vmatprep.mubr.f32.mxu0 0.0
        %v1285 = vand.u32 %v1040, 4294901760
        %1286 = vmatmul.mubr.f32.gmra.mxu0 %v1285
        %v1287 = vpop.f32.mrf.mxu0
        %v1288 = vadd.f32 %v1155, %v1287
        %v1289 = vpop.f32.mrf.mxu0
        %v1290 = vadd.f32 %v1157, %v1289
        %1291 = vdwg.mxu0
        %1292 = vmatprep.subr.mxu0 0.0
        %1293 = vmatpush1.msra.mxu0 0.0
        %1294 = vmatprep.subr.mxu0 0.0
        %1295 = vmatpush1.msra.mxu0 0.0
        %1296 = vmatprep.subr.mxu0 0.0
        %1297 = vmatpush1.msra.mxu0 0.0
        %1298 = vmatprep.subr.mxu0 0.0
        %1299 = vmatpush1.msra.mxu0 0.0
        %1300 = vmatprep.subr.mxu0 0.0
        %1301 = vmatpush1.msra.mxu0 0.0
        %1302 = vmatprep.subr.mxu0 0.0
        %1303 = vmatpush1.msra.mxu0 0.0
        %1304 = vmatprep.subr.mxu0 0.0
        %1305 = vmatpush1.msra.mxu0 0.0
        %1306 = vmatprep.subr.mxu0 0.0
        %1307 = vmatpush1.msra.mxu0 0.0
        %1308 = vmatprep.subr.mxu0 0.0
        %1309 = vmatpush1.msra.mxu0 0.0
        %1310 = vmatprep.subr.mxu0 0.0
        %1311 = vmatpush1.msra.mxu0 0.0
        %1312 = vmatprep.subr.mxu0 0.0
        %1313 = vmatpush1.msra.mxu0 0.0
        %1314 = vmatprep.subr.mxu0 0.0
        %1315 = vmatpush1.msra.mxu0 0.0
        %v1316 = vand.u32 %v1009, 4294901760
        %v1317 = vsub.f32 %v1009, %v1316
        %1318 = vmatprep.subr.mxu0 %v1317
        %v1319 = vand.u32 %v1008, 4294901760
        %v1320 = vsub.f32 %v1008, %v1319
        %1321 = vmatpush1.msra.mxu0 %v1320
        %v1322 = vand.u32 %v1007, 4294901760
        %v1323 = vsub.f32 %v1007, %v1322
        %1324 = vmatprep.subr.mxu0 %v1323
        %v1325 = vand.u32 %v1006, 4294901760
        %v1326 = vsub.f32 %v1006, %v1325
        %1327 = vmatpush1.msra.mxu0 %v1326
        %v1328 = vand.u32 %v1005, 4294901760
        %v1329 = vsub.f32 %v1005, %v1328
        %1330 = vmatprep.subr.mxu0 %v1329
        %v1331 = vand.u32 %v1004, 4294901760
        %v1332 = vsub.f32 %v1004, %v1331
        %1333 = vmatpush1.msra.mxu0 %v1332
        %v1334 = vand.u32 %v1003, 4294901760
        %v1335 = vsub.f32 %v1003, %v1334
        %1336 = vmatprep.subr.mxu0 %v1335
        %v1337 = vand.u32 %v1002, 4294901760
        %v1338 = vsub.f32 %v1002, %v1337
        %1339 = vmatpush1.msra.mxu0 %v1338
        %1340 = vmatprep.subr.mxu0 0.0
        %1341 = vmatpush2.msra.mxu0 0.0
        %1342 = vmatprep.subr.mxu0 0.0
        %1343 = vmatpush2.msra.mxu0 0.0
        %1344 = vmatprep.subr.mxu0 0.0
        %1345 = vmatpush2.msra.mxu0 0.0
        %1346 = vmatprep.subr.mxu0 0.0
        %1347 = vmatpush2.msra.mxu0 0.0
        %1348 = vmatprep.subr.mxu0 0.0
        %1349 = vmatpush2.msra.mxu0 0.0
        %1350 = vmatprep.subr.mxu0 0.0
        %1351 = vmatpush2.msra.mxu0 0.0
        %1352 = vmatprep.subr.mxu0 0.0
        %1353 = vmatpush2.msra.mxu0 0.0
        %1354 = vmatprep.subr.mxu0 0.0
        %1355 = vmatpush2.msra.mxu0 0.0
        %1356 = vmatprep.subr.mxu0 0.0
        %1357 = vmatpush2.msra.mxu0 0.0
        %1358 = vmatprep.subr.mxu0 0.0
        %1359 = vmatpush2.msra.mxu0 0.0
        %1360 = vmatprep.subr.mxu0 0.0
        %1361 = vmatpush2.msra.mxu0 0.0
        %1362 = vmatprep.subr.mxu0 0.0
        %1363 = vmatpush2.msra.mxu0 0.0
        %1364 = vmatprep.subr.mxu0 0.0
        %1365 = vmatpush2.msra.mxu0 0.0
        %1366 = vmatprep.subr.mxu0 0.0
        %1367 = vmatpush2.msra.mxu0 0.0
        %1368 = vmatprep.subr.mxu0 0.0
        %1369 = vmatpush2.msra.mxu0 0.0
        %1370 = vmatprep.subr.mxu0 0.0
        %1371 = vmatpush2.msra.mxu0 0.0
        %1372 = vmatprep.mubr.f32.mxu0 0.0
        %v1373 = vand.u32 %v1034, 4294901760
        %v1374 = vsub.f32 %v1034, %v1373
        %1375 = vmatmul.mubr.f32.gmra.mxu0 %v1374
        %v1376 = vpop.f32.mrf.mxu0
        %v1377 = vadd.f32 %v1267, %v1376
        %v1378 = vpop.f32.mrf.mxu0
        %v1379 = vadd.f32 %v1269, %v1378
        %1380 = vmatprep.mubr.f32.mxu0 0.0
        %v1381 = vand.u32 %v1036, 4294901760
        %v1382 = vsub.f32 %v1036, %v1381
        %1383 = vmatmul.mubr.f32.gmra.mxu0 %v1382
        %v1384 = vpop.f32.mrf.mxu0
        %v1385 = vadd.f32 %v1274, %v1384
        %v1386 = vpop.f32.mrf.mxu0
        %v1387 = vadd.f32 %v1276, %v1386
        %1388 = vmatprep.mubr.f32.mxu0 0.0
        %v1389 = vand.u32 %v1038, 4294901760
        %v1390 = vsub.f32 %v1038, %v1389
        %1391 = vmatmul.mubr.f32.gmra.mxu0 %v1390
        %v1392 = vpop.f32.mrf.mxu0
        %v1393 = vadd.f32 %v1281, %v1392
        %v1394 = vpop.f32.mrf.mxu0
        %v1395 = vadd.f32 %v1283, %v1394
        %1396 = vmatprep.mubr.f32.mxu0 0.0
        %v1397 = vand.u32 %v1040, 4294901760
        %v1398 = vsub.f32 %v1040, %v1397
        %1399 = vmatmul.mubr.f32.gmra.mxu0 %v1398
        %v1400 = vpop.f32.mrf.mxu0
        %v1401 = vadd.f32 %v1288, %v1400
        %v1402 = vpop.f32.mrf.mxu0
        %v1403 = vadd.f32 %v1290, %v1402
        %1404 = vdwg.mxu0
        %1405 = vmatprep.subr.mxu0 0.0
        %1406 = vmatpush1.msra.mxu0 0.0
        %1407 = vmatprep.subr.mxu0 0.0
        %1408 = vmatpush1.msra.mxu0 0.0
        %1409 = vmatprep.subr.mxu0 0.0
        %1410 = vmatpush1.msra.mxu0 0.0
        %1411 = vmatprep.subr.mxu0 0.0
        %1412 = vmatpush1.msra.mxu0 0.0
        %1413 = vmatprep.subr.mxu0 0.0
        %1414 = vmatpush1.msra.mxu0 0.0
        %1415 = vmatprep.subr.mxu0 0.0
        %1416 = vmatpush1.msra.mxu0 0.0
        %1417 = vmatprep.subr.mxu0 0.0
        %1418 = vmatpush1.msra.mxu0 0.0
        %1419 = vmatprep.subr.mxu0 0.0
        %1420 = vmatpush1.msra.mxu0 0.0
        %1421 = vmatprep.subr.mxu0 0.0
        %1422 = vmatpush1.msra.mxu0 0.0
        %1423 = vmatprep.subr.mxu0 0.0
        %1424 = vmatpush1.msra.mxu0 0.0
        %1425 = vmatprep.subr.mxu0 0.0
        %1426 = vmatpush1.msra.mxu0 0.0
        %1427 = vmatprep.subr.mxu0 0.0
        %1428 = vmatpush1.msra.mxu0 0.0
        %v1429 = vand.u32 %v1009, 4294901760
        %1430 = vmatprep.subr.mxu0 %v1429
        %v1431 = vand.u32 %v1008, 4294901760
        %1432 = vmatpush1.msra.mxu0 %v1431
        %v1433 = vand.u32 %v1007, 4294901760
        %1434 = vmatprep.subr.mxu0 %v1433
        %v1435 = vand.u32 %v1006, 4294901760
        %1436 = vmatpush1.msra.mxu0 %v1435
        %v1437 = vand.u32 %v1005, 4294901760
        %1438 = vmatprep.subr.mxu0 %v1437
        %v1439 = vand.u32 %v1004, 4294901760
        %1440 = vmatpush1.msra.mxu0 %v1439
        %v1441 = vand.u32 %v1003, 4294901760
        %1442 = vmatprep.subr.mxu0 %v1441
        %v1443 = vand.u32 %v1002, 4294901760
        %1444 = vmatpush1.msra.mxu0 %v1443
        %1445 = vmatprep.subr.mxu0 0.0
        %1446 = vmatpush2.msra.mxu0 0.0
        %1447 = vmatprep.subr.mxu0 0.0
        %1448 = vmatpush2.msra.mxu0 0.0
        %1449 = vmatprep.subr.mxu0 0.0
        %1450 = vmatpush2.msra.mxu0 0.0
        %1451 = vmatprep.subr.mxu0 0.0
        %1452 = vmatpush2.msra.mxu0 0.0
        %1453 = vmatprep.subr.mxu0 0.0
        %1454 = vmatpush2.msra.mxu0 0.0
        %1455 = vmatprep.subr.mxu0 0.0
        %1456 = vmatpush2.msra.mxu0 0.0
        %1457 = vmatprep.subr.mxu0 0.0
        %1458 = vmatpush2.msra.mxu0 0.0
        %1459 = vmatprep.subr.mxu0 0.0
        %1460 = vmatpush2.msra.mxu0 0.0
        %1461 = vmatprep.subr.mxu0 0.0
        %1462 = vmatpush2.msra.mxu0 0.0
        %1463 = vmatprep.subr.mxu0 0.0
        %1464 = vmatpush2.msra.mxu0 0.0
        %1465 = vmatprep.subr.mxu0 0.0
        %1466 = vmatpush2.msra.mxu0 0.0
        %1467 = vmatprep.subr.mxu0 0.0
        %1468 = vmatpush2.msra.mxu0 0.0
        %1469 = vmatprep.subr.mxu0 0.0
        %1470 = vmatpush2.msra.mxu0 0.0
        %1471 = vmatprep.subr.mxu0 0.0
        %1472 = vmatpush2.msra.mxu0 0.0
        %1473 = vmatprep.subr.mxu0 0.0
        %1474 = vmatpush2.msra.mxu0 0.0
        %1475 = vmatprep.subr.mxu0 0.0
        %1476 = vmatpush2.msra.mxu0 0.0
        %1477 = vmatprep.mubr.f32.mxu0 0.0
        %v1478 = vand.u32 %v1034, 4294901760
        %v1479 = vsub.f32 %v1034, %v1478
        %v1480 = vand.u32 %v1479, 4294901760
        %1481 = vmatmul.mubr.f32.gmra.mxu0 %v1480
        %v1482 = vpop.f32.mrf.mxu0
        %v1483 = vadd.f32 %v1377, %v1482
        %v1484 = vpop.f32.mrf.mxu0
        %v1485 = vadd.f32 %v1379, %v1484
        %1486 = vmatprep.mubr.f32.mxu0 0.0
        %v1487 = vand.u32 %v1036, 4294901760
        %v1488 = vsub.f32 %v1036, %v1487
        %v1489 = vand.u32 %v1488, 4294901760
        %1490 = vmatmul.mubr.f32.gmra.mxu0 %v1489
        %v1491 = vpop.f32.mrf.mxu0
        %v1492 = vadd.f32 %v1385, %v1491
        %v1493 = vpop.f32.mrf.mxu0
        %v1494 = vadd.f32 %v1387, %v1493
        %1495 = vmatprep.mubr.f32.mxu0 0.0
        %v1496 = vand.u32 %v1038, 4294901760
        %v1497 = vsub.f32 %v1038, %v1496
        %v1498 = vand.u32 %v1497, 4294901760
        %1499 = vmatmul.mubr.f32.gmra.mxu0 %v1498
        %v1500 = vpop.f32.mrf.mxu0
        %v1501 = vadd.f32 %v1393, %v1500
        %v1502 = vpop.f32.mrf.mxu0
        %v1503 = vadd.f32 %v1395, %v1502
        %1504 = vmatprep.mubr.f32.mxu0 0.0
        %v1505 = vand.u32 %v1040, 4294901760
        %v1506 = vsub.f32 %v1040, %v1505
        %v1507 = vand.u32 %v1506, 4294901760
        %1508 = vmatmul.mubr.f32.gmra.mxu0 %v1507
        %v1509 = vpop.f32.mrf.mxu0
        %v1510 = vadd.f32 %v1401, %v1509
        %v1511 = vpop.f32.mrf.mxu0
        %v1512 = vadd.f32 %v1403, %v1511
        %1513 = vdwg.mxu0
        %1514 = vmatprep.subr.mxu0 0.0
        %1515 = vmatpush1.msra.mxu0 0.0
        %1516 = vmatprep.subr.mxu0 0.0
        %1517 = vmatpush1.msra.mxu0 0.0
        %1518 = vmatprep.subr.mxu0 0.0
        %1519 = vmatpush1.msra.mxu0 0.0
        %1520 = vmatprep.subr.mxu0 0.0
        %1521 = vmatpush1.msra.mxu0 0.0
        %1522 = vmatprep.subr.mxu0 0.0
        %1523 = vmatpush1.msra.mxu0 0.0
        %1524 = vmatprep.subr.mxu0 0.0
        %1525 = vmatpush1.msra.mxu0 0.0
        %1526 = vmatprep.subr.mxu0 0.0
        %1527 = vmatpush1.msra.mxu0 0.0
        %1528 = vmatprep.subr.mxu0 0.0
        %1529 = vmatpush1.msra.mxu0 0.0
        %1530 = vmatprep.subr.mxu0 0.0
        %1531 = vmatpush1.msra.mxu0 0.0
        %1532 = vmatprep.subr.mxu0 0.0
        %1533 = vmatpush1.msra.mxu0 0.0
        %1534 = vmatprep.subr.mxu0 0.0
        %1535 = vmatpush1.msra.mxu0 0.0
        %1536 = vmatprep.subr.mxu0 0.0
        %1537 = vmatpush1.msra.mxu0 0.0
        %v1538 = vand.u32 %v1009, 4294901760
        %v1539 = vsub.f32 %v1009, %v1538
        %v1540 = vand.u32 %v1539, 4294901760
        %1541 = vmatprep.subr.mxu0 %v1540
        %v1542 = vand.u32 %v1008, 4294901760
        %v1543 = vsub.f32 %v1008, %v1542
        %v1544 = vand.u32 %v1543, 4294901760
        %1545 = vmatpush1.msra.mxu0 %v1544
        %v1546 = vand.u32 %v1007, 4294901760
        %v1547 = vsub.f32 %v1007, %v1546
        %v1548 = vand.u32 %v1547, 4294901760
        %1549 = vmatprep.subr.mxu0 %v1548
        %v1550 = vand.u32 %v1006, 4294901760
        %v1551 = vsub.f32 %v1006, %v1550
        %v1552 = vand.u32 %v1551, 4294901760
        %1553 = vmatpush1.msra.mxu0 %v1552
        %v1554 = vand.u32 %v1005, 4294901760
        %v1555 = vsub.f32 %v1005, %v1554
        %v1556 = vand.u32 %v1555, 4294901760
        %1557 = vmatprep.subr.mxu0 %v1556
        %v1558 = vand.u32 %v1004, 4294901760
        %v1559 = vsub.f32 %v1004, %v1558
        %v1560 = vand.u32 %v1559, 4294901760
        %1561 = vmatpush1.msra.mxu0 %v1560
        %v1562 = vand.u32 %v1003, 4294901760
        %v1563 = vsub.f32 %v1003, %v1562
        %v1564 = vand.u32 %v1563, 4294901760
        %1565 = vmatprep.subr.mxu0 %v1564
        %v1566 = vand.u32 %v1002, 4294901760
        %v1567 = vsub.f32 %v1002, %v1566
        %v1568 = vand.u32 %v1567, 4294901760
        %1569 = vmatpush1.msra.mxu0 %v1568
        %1570 = vmatprep.subr.mxu0 0.0
        %1571 = vmatpush2.msra.mxu0 0.0
        %1572 = vmatprep.subr.mxu0 0.0
        %1573 = vmatpush2.msra.mxu0 0.0
        %1574 = vmatprep.subr.mxu0 0.0
        %1575 = vmatpush2.msra.mxu0 0.0
        %1576 = vmatprep.subr.mxu0 0.0
        %1577 = vmatpush2.msra.mxu0 0.0
        %1578 = vmatprep.subr.mxu0 0.0
        %1579 = vmatpush2.msra.mxu0 0.0
        %1580 = vmatprep.subr.mxu0 0.0
        %1581 = vmatpush2.msra.mxu0 0.0
        %1582 = vmatprep.subr.mxu0 0.0
        %1583 = vmatpush2.msra.mxu0 0.0
        %1584 = vmatprep.subr.mxu0 0.0
        %1585 = vmatpush2.msra.mxu0 0.0
        %1586 = vmatprep.subr.mxu0 0.0
        %1587 = vmatpush2.msra.mxu0 0.0
        %1588 = vmatprep.subr.mxu0 0.0
        %1589 = vmatpush2.msra.mxu0 0.0
        %1590 = vmatprep.subr.mxu0 0.0
        %1591 = vmatpush2.msra.mxu0 0.0
        %1592 = vmatprep.subr.mxu0 0.0
        %1593 = vmatpush2.msra.mxu0 0.0
        %1594 = vmatprep.subr.mxu0 0.0
        %1595 = vmatpush2.msra.mxu0 0.0
        %1596 = vmatprep.subr.mxu0 0.0
        %1597 = vmatpush2.msra.mxu0 0.0
        %1598 = vmatprep.subr.mxu0 0.0
        %1599 = vmatpush2.msra.mxu0 0.0
        %1600 = vmatprep.subr.mxu0 0.0
        %1601 = vmatpush2.msra.mxu0 0.0
        %1602 = vmatprep.mubr.f32.mxu0 0.0
        %v1603 = vand.u32 %v1034, 4294901760
        %1604 = vmatmul.mubr.f32.gmra.mxu0 %v1603
        %v1605 = vpop.f32.mrf.mxu0
        %v1606 = vadd.f32 %v1483, %v1605
        %v1607 = vpop.f32.mrf.mxu0
        %v1608 = vadd.f32 %v1485, %v1607
        %1609 = vmatprep.mubr.f32.mxu0 0.0
        %v1610 = vand.u32 %v1036, 4294901760
        %1611 = vmatmul.mubr.f32.gmra.mxu0 %v1610
        %v1612 = vpop.f32.mrf.mxu0
        %v1613 = vadd.f32 %v1492, %v1612
        %v1614 = vpop.f32.mrf.mxu0
        %v1615 = vadd.f32 %v1494, %v1614
        %1616 = vmatprep.mubr.f32.mxu0 0.0
        %v1617 = vand.u32 %v1038, 4294901760
        %1618 = vmatmul.mubr.f32.gmra.mxu0 %v1617
        %v1619 = vpop.f32.mrf.mxu0
        %v1620 = vadd.f32 %v1501, %v1619
        %v1621 = vpop.f32.mrf.mxu0
        %v1622 = vadd.f32 %v1503, %v1621
        %1623 = vmatprep.mubr.f32.mxu0 0.0
        %v1624 = vand.u32 %v1040, 4294901760
        %1625 = vmatmul.mubr.f32.gmra.mxu0 %v1624
        %v1626 = vpop.f32.mrf.mxu0
        %v1627 = vadd.f32 %v1510, %v1626
        %v1628 = vpop.f32.mrf.mxu0
        %v1629 = vadd.f32 %v1512, %v1628
        %1630 = vdwg.mxu0
        %1631 = vmatprep.subr.mxu0 0.0
        %1632 = vmatpush1.msra.mxu0 0.0
        %1633 = vmatprep.subr.mxu0 0.0
        %1634 = vmatpush1.msra.mxu0 0.0
        %1635 = vmatprep.subr.mxu0 0.0
        %1636 = vmatpush1.msra.mxu0 0.0
        %1637 = vmatprep.subr.mxu0 0.0
        %1638 = vmatpush1.msra.mxu0 0.0
        %1639 = vmatprep.subr.mxu0 0.0
        %1640 = vmatpush1.msra.mxu0 0.0
        %1641 = vmatprep.subr.mxu0 0.0
        %1642 = vmatpush1.msra.mxu0 0.0
        %1643 = vmatprep.subr.mxu0 0.0
        %1644 = vmatpush1.msra.mxu0 0.0
        %1645 = vmatprep.subr.mxu0 0.0
        %1646 = vmatpush1.msra.mxu0 0.0
        %1647 = vmatprep.subr.mxu0 0.0
        %1648 = vmatpush1.msra.mxu0 0.0
        %1649 = vmatprep.subr.mxu0 0.0
        %1650 = vmatpush1.msra.mxu0 0.0
        %1651 = vmatprep.subr.mxu0 0.0
        %1652 = vmatpush1.msra.mxu0 0.0
        %1653 = vmatprep.subr.mxu0 0.0
        %1654 = vmatpush1.msra.mxu0 0.0
        %v1655 = vand.u32 %v1009, 4294901760
        %1656 = vmatprep.subr.mxu0 %v1655
        %v1657 = vand.u32 %v1008, 4294901760
        %1658 = vmatpush1.msra.mxu0 %v1657
        %v1659 = vand.u32 %v1007, 4294901760
        %1660 = vmatprep.subr.mxu0 %v1659
        %v1661 = vand.u32 %v1006, 4294901760
        %1662 = vmatpush1.msra.mxu0 %v1661
        %v1663 = vand.u32 %v1005, 4294901760
        %1664 = vmatprep.subr.mxu0 %v1663
        %v1665 = vand.u32 %v1004, 4294901760
        %1666 = vmatpush1.msra.mxu0 %v1665
        %v1667 = vand.u32 %v1003, 4294901760
        %1668 = vmatprep.subr.mxu0 %v1667
        %v1669 = vand.u32 %v1002, 4294901760
        %1670 = vmatpush1.msra.mxu0 %v1669
        %1671 = vmatprep.subr.mxu0 0.0
        %1672 = vmatpush2.msra.mxu0 0.0
        %1673 = vmatprep.subr.mxu0 0.0
        %1674 = vmatpush2.msra.mxu0 0.0
        %1675 = vmatprep.subr.mxu0 0.0
        %1676 = vmatpush2.msra.mxu0 0.0
        %1677 = vmatprep.subr.mxu0 0.0
        %1678 = vmatpush2.msra.mxu0 0.0
        %1679 = vmatprep.subr.mxu0 0.0
        %1680 = vmatpush2.msra.mxu0 0.0
        %1681 = vmatprep.subr.mxu0 0.0
        %1682 = vmatpush2.msra.mxu0 0.0
        %1683 = vmatprep.subr.mxu0 0.0
        %1684 = vmatpush2.msra.mxu0 0.0
        %1685 = vmatprep.subr.mxu0 0.0
        %1686 = vmatpush2.msra.mxu0 0.0
        %1687 = vmatprep.subr.mxu0 0.0
        %1688 = vmatpush2.msra.mxu0 0.0
        %1689 = vmatprep.subr.mxu0 0.0
        %1690 = vmatpush2.msra.mxu0 0.0
        %1691 = vmatprep.subr.mxu0 0.0
        %1692 = vmatpush2.msra.mxu0 0.0
        %1693 = vmatprep.subr.mxu0 0.0
        %1694 = vmatpush2.msra.mxu0 0.0
        %1695 = vmatprep.subr.mxu0 0.0
        %1696 = vmatpush2.msra.mxu0 0.0
        %1697 = vmatprep.subr.mxu0 0.0
        %1698 = vmatpush2.msra.mxu0 0.0
        %1699 = vmatprep.subr.mxu0 0.0
        %1700 = vmatpush2.msra.mxu0 0.0
        %1701 = vmatprep.subr.mxu0 0.0
        %1702 = vmatpush2.msra.mxu0 0.0
        %1703 = vmatprep.mubr.f32.mxu0 0.0
        %v1704 = vand.u32 %v1034, 4294901760
        %1705 = vmatmul.mubr.f32.gmra.mxu0 %v1704
        %v1706 = vpop.f32.mrf.mxu0
        %v1707 = vadd.f32 %v1606, %v1706
        %v1708 = vpop.f32.mrf.mxu0
        %v1709 = vadd.f32 %v1608, %v1708
        %1710 = vmatprep.mubr.f32.mxu0 0.0
        %v1711 = vand.u32 %v1036, 4294901760
        %1712 = vmatmul.mubr.f32.gmra.mxu0 %v1711
        %v1713 = vpop.f32.mrf.mxu0
        %v1714 = vadd.f32 %v1613, %v1713
        %v1715 = vpop.f32.mrf.mxu0
        %v1716 = vadd.f32 %v1615, %v1715
        %1717 = vmatprep.mubr.f32.mxu0 0.0
        %v1718 = vand.u32 %v1038, 4294901760
        %1719 = vmatmul.mubr.f32.gmra.mxu0 %v1718
        %v1720 = vpop.f32.mrf.mxu0
        %v1721 = vadd.f32 %v1620, %v1720
        %v1722 = vpop.f32.mrf.mxu0
        %v1723 = vadd.f32 %v1622, %v1722
        %1724 = vmatprep.mubr.f32.mxu0 0.0
        %v1725 = vand.u32 %v1040, 4294901760
        %1726 = vmatmul.mubr.f32.gmra.mxu0 %v1725
        %v1727 = vpop.f32.mrf.mxu0
        %v1728 = vadd.f32 %v1627, %v1727
        %v1729 = vpop.f32.mrf.mxu0
        %v1730 = vadd.f32 %v1629, %v1729
        %1731 = vdwg.mxu0
        %v1732 = vtanh.pop %v1707
        %v1733 = vtanh.pop %v1709
        %v1734 = vtanh.pop %v1714
        %v1735 = vtanh.pop %v1716
        %v1736 = vtanh.pop %v1721
        %v1737 = vtanh.pop %v1723
        %v1738 = vtanh.pop %v1728
        %v1739 = vtanh.pop %v1730
        %v1740 = vld [vmem:[%s1 + $0x60] sm:$0x3]
        %1742 = vset.pattern.permute.xlu0 32
        %1743 = vperm.xlu0 %1742, %v1740
        %v1744 = vpop.permute.xlu0 %1743
        %v1746 = vsel %vm303, %v1740, 0
        %1748 = vmatprep.subr.mxu0 0.0
        %1749 = vmatpush1.msra.mxu0 0.0
        %1750 = vmatprep.subr.mxu0 0.0
        %1751 = vmatpush1.msra.mxu0 0.0
        %1752 = vmatprep.subr.mxu0 0.0
        %1753 = vmatpush1.msra.mxu0 0.0
        %1754 = vmatprep.subr.mxu0 0.0
        %1755 = vmatpush1.msra.mxu0 0.0
        %1756 = vmatprep.subr.mxu0 0.0
        %1757 = vmatpush1.msra.mxu0 0.0
        %1758 = vmatprep.subr.mxu0 0.0
        %1759 = vmatpush1.msra.mxu0 0.0
        %1760 = vmatprep.subr.mxu0 0.0
        %1761 = vmatpush1.msra.mxu0 0.0
        %1762 = vmatprep.subr.mxu0 0.0
        %1763 = vmatpush1.msra.mxu0 0.0
        %1764 = vmatprep.subr.mxu0 0.0
        %1765 = vmatpush1.msra.mxu0 0.0
        %1766 = vmatprep.subr.mxu0 0.0
        %1767 = vmatpush1.msra.mxu0 0.0
        %1768 = vmatprep.subr.mxu0 0.0
        %1769 = vmatpush1.msra.mxu0 0.0
        %1770 = vmatprep.subr.mxu0 0.0
        %1771 = vmatpush1.msra.mxu0 0.0
        %v1772 = vand.u32 %v1739, 4294901760
        %1773 = vmatprep.subr.mxu0 %v1772
        %v1774 = vand.u32 %v1738, 4294901760
        %1775 = vmatpush1.msra.mxu0 %v1774
        %v1776 = vand.u32 %v1737, 4294901760
        %1777 = vmatprep.subr.mxu0 %v1776
        %v1778 = vand.u32 %v1736, 4294901760
        %1779 = vmatpush1.msra.mxu0 %v1778
        %v1780 = vand.u32 %v1735, 4294901760
        %1781 = vmatprep.subr.mxu0 %v1780
        %v1782 = vand.u32 %v1734, 4294901760
        %1783 = vmatpush1.msra.mxu0 %v1782
        %v1784 = vand.u32 %v1733, 4294901760
        %1785 = vmatprep.subr.mxu0 %v1784
        %v1786 = vand.u32 %v1732, 4294901760
        %1787 = vmatpush1.msra.mxu0 %v1786
        %1788 = vmatprep.subr.mxu0 0.0
        %1789 = vmatpush2.msra.mxu0 0.0
        %1790 = vmatprep.subr.mxu0 0.0
        %1791 = vmatpush2.msra.mxu0 0.0
        %1792 = vmatprep.subr.mxu0 0.0
        %1793 = vmatpush2.msra.mxu0 0.0
        %1794 = vmatprep.subr.mxu0 0.0
        %1795 = vmatpush2.msra.mxu0 0.0
        %1796 = vmatprep.subr.mxu0 0.0
        %1797 = vmatpush2.msra.mxu0 0.0
        %1798 = vmatprep.subr.mxu0 0.0
        %1799 = vmatpush2.msra.mxu0 0.0
        %1800 = vmatprep.subr.mxu0 0.0
        %1801 = vmatpush2.msra.mxu0 0.0
        %1802 = vmatprep.subr.mxu0 0.0
        %1803 = vmatpush2.msra.mxu0 0.0
        %1804 = vmatprep.subr.mxu0 0.0
        %1805 = vmatpush2.msra.mxu0 0.0
        %1806 = vmatprep.subr.mxu0 0.0
        %1807 = vmatpush2.msra.mxu0 0.0
        %1808 = vmatprep.subr.mxu0 0.0
        %1809 = vmatpush2.msra.mxu0 0.0
        %1810 = vmatprep.subr.mxu0 0.0
        %1811 = vmatpush2.msra.mxu0 0.0
        %1812 = vmatprep.subr.mxu0 0.0
        %1813 = vmatpush2.msra.mxu0 0.0
        %1814 = vmatprep.subr.mxu0 0.0
        %1815 = vmatpush2.msra.mxu0 0.0
        %1816 = vmatprep.subr.mxu0 0.0
        %1817 = vmatpush2.msra.mxu0 0.0
        %1818 = vmatprep.subr.mxu0 0.0
        %1819 = vmatpush2.msra.mxu0 0.0
        %1820 = vmatprep.mubr.f32.mxu0 0.0
        %v1821 = vand.u32 %v1746, 4294901760
        %v1822 = vsub.f32 %v1746, %v1821
        %v1823 = vand.u32 %v1822, 4294901760
        %v1824 = vsub.f32 %v1822, %v1823
        %v1825 = vand.u32 %v1824, 4294901760
        %1826 = vmatmul.mubr.f32.gmra.mxu0 %v1825
        %v1827 = vpop.f32.mrf.mxu0
        %v1828 = vadd.f32 %v1744, %v1827
        %v1829 = vpop.f32.mrf.mxu0
        %v1830 = vadd.f32 %v1744, %v1829
        %1831 = vdwg.mxu0
        %1832 = vmatprep.subr.mxu0 0.0
        %1833 = vmatpush1.msra.mxu0 0.0
        %1834 = vmatprep.subr.mxu0 0.0
        %1835 = vmatpush1.msra.mxu0 0.0
        %1836 = vmatprep.subr.mxu0 0.0
        %1837 = vmatpush1.msra.mxu0 0.0
        %1838 = vmatprep.subr.mxu0 0.0
        %1839 = vmatpush1.msra.mxu0 0.0
        %1840 = vmatprep.subr.mxu0 0.0
        %1841 = vmatpush1.msra.mxu0 0.0
        %1842 = vmatprep.subr.mxu0 0.0
        %1843 = vmatpush1.msra.mxu0 0.0
        %1844 = vmatprep.subr.mxu0 0.0
        %1845 = vmatpush1.msra.mxu0 0.0
        %1846 = vmatprep.subr.mxu0 0.0
        %1847 = vmatpush1.msra.mxu0 0.0
        %1848 = vmatprep.subr.mxu0 0.0
        %1849 = vmatpush1.msra.mxu0 0.0
        %1850 = vmatprep.subr.mxu0 0.0
        %1851 = vmatpush1.msra.mxu0 0.0
        %1852 = vmatprep.subr.mxu0 0.0
        %1853 = vmatpush1.msra.mxu0 0.0
        %1854 = vmatprep.subr.mxu0 0.0
        %1855 = vmatpush1.msra.mxu0 0.0
        %v1856 = vand.u32 %v1739, 4294901760
        %v1857 = vsub.f32 %v1739, %v1856
        %v1858 = vand.u32 %v1857, 4294901760
        %v1859 = vsub.f32 %v1857, %v1858
        %v1860 = vand.u32 %v1859, 4294901760
        %1861 = vmatprep.subr.mxu0 %v1860
        %v1862 = vand.u32 %v1738, 4294901760
        %v1863 = vsub.f32 %v1738, %v1862
        %v1864 = vand.u32 %v1863, 4294901760
        %v1865 = vsub.f32 %v1863, %v1864
        %v1866 = vand.u32 %v1865, 4294901760
        %1867 = vmatpush1.msra.mxu0 %v1866
        %v1868 = vand.u32 %v1737, 4294901760
        %v1869 = vsub.f32 %v1737, %v1868
        %v1870 = vand.u32 %v1869, 4294901760
        %v1871 = vsub.f32 %v1869, %v1870
        %v1872 = vand.u32 %v1871, 4294901760
        %1873 = vmatprep.subr.mxu0 %v1872
        %v1874 = vand.u32 %v1736, 4294901760
        %v1875 = vsub.f32 %v1736, %v1874
        %v1876 = vand.u32 %v1875, 4294901760
        %v1877 = vsub.f32 %v1875, %v1876
        %v1878 = vand.u32 %v1877, 4294901760
        %1879 = vmatpush1.msra.mxu0 %v1878
        %v1880 = vand.u32 %v1735, 4294901760
        %v1881 = vsub.f32 %v1735, %v1880
        %v1882 = vand.u32 %v1881, 4294901760
        %v1883 = vsub.f32 %v1881, %v1882
        %v1884 = vand.u32 %v1883, 4294901760
        %1885 = vmatprep.subr.mxu0 %v1884
        %v1886 = vand.u32 %v1734, 4294901760
        %v1887 = vsub.f32 %v1734, %v1886
        %v1888 = vand.u32 %v1887, 4294901760
        %v1889 = vsub.f32 %v1887, %v1888
        %v1890 = vand.u32 %v1889, 4294901760
        %1891 = vmatpush1.msra.mxu0 %v1890
        %v1892 = vand.u32 %v1733, 4294901760
        %v1893 = vsub.f32 %v1733, %v1892
        %v1894 = vand.u32 %v1893, 4294901760
        %v1895 = vsub.f32 %v1893, %v1894
        %v1896 = vand.u32 %v1895, 4294901760
        %1897 = vmatprep.subr.mxu0 %v1896
        %v1898 = vand.u32 %v1732, 4294901760
        %v1899 = vsub.f32 %v1732, %v1898
        %v1900 = vand.u32 %v1899, 4294901760
        %v1901 = vsub.f32 %v1899, %v1900
        %v1902 = vand.u32 %v1901, 4294901760
        %1903 = vmatpush1.msra.mxu0 %v1902
        %1904 = vmatprep.subr.mxu0 0.0
        %1905 = vmatpush2.msra.mxu0 0.0
        %1906 = vmatprep.subr.mxu0 0.0
        %1907 = vmatpush2.msra.mxu0 0.0
        %1908 = vmatprep.subr.mxu0 0.0
        %1909 = vmatpush2.msra.mxu0 0.0
        %1910 = vmatprep.subr.mxu0 0.0
        %1911 = vmatpush2.msra.mxu0 0.0
        %1912 = vmatprep.subr.mxu0 0.0
        %1913 = vmatpush2.msra.mxu0 0.0
        %1914 = vmatprep.subr.mxu0 0.0
        %1915 = vmatpush2.msra.mxu0 0.0
        %1916 = vmatprep.subr.mxu0 0.0
        %1917 = vmatpush2.msra.mxu0 0.0
        %1918 = vmatprep.subr.mxu0 0.0
        %1919 = vmatpush2.msra.mxu0 0.0
        %1920 = vmatprep.subr.mxu0 0.0
        %1921 = vmatpush2.msra.mxu0 0.0
        %1922 = vmatprep.subr.mxu0 0.0
        %1923 = vmatpush2.msra.mxu0 0.0
        %1924 = vmatprep.subr.mxu0 0.0
        %1925 = vmatpush2.msra.mxu0 0.0
        %1926 = vmatprep.subr.mxu0 0.0
        %1927 = vmatpush2.msra.mxu0 0.0
        %1928 = vmatprep.subr.mxu0 0.0
        %1929 = vmatpush2.msra.mxu0 0.0
        %1930 = vmatprep.subr.mxu0 0.0
        %1931 = vmatpush2.msra.mxu0 0.0
        %1932 = vmatprep.subr.mxu0 0.0
        %1933 = vmatpush2.msra.mxu0 0.0
        %1934 = vmatprep.subr.mxu0 0.0
        %1935 = vmatpush2.msra.mxu0 0.0
        %1936 = vmatprep.mubr.f32.mxu0 0.0
        %v1937 = vand.u32 %v1746, 4294901760
        %1938 = vmatmul.mubr.f32.gmra.mxu0 %v1937
        %v1939 = vpop.f32.mrf.mxu0
        %v1940 = vadd.f32 %v1828, %v1939
        %v1941 = vpop.f32.mrf.mxu0
        %v1942 = vadd.f32 %v1830, %v1941
        %1943 = vdwg.mxu0
        %1944 = vmatprep.subr.mxu0 0.0
        %1945 = vmatpush1.msra.mxu0 0.0
        %1946 = vmatprep.subr.mxu0 0.0
        %1947 = vmatpush1.msra.mxu0 0.0
        %1948 = vmatprep.subr.mxu0 0.0
        %1949 = vmatpush1.msra.mxu0 0.0
        %1950 = vmatprep.subr.mxu0 0.0
        %1951 = vmatpush1.msra.mxu0 0.0
        %1952 = vmatprep.subr.mxu0 0.0
        %1953 = vmatpush1.msra.mxu0 0.0
        %1954 = vmatprep.subr.mxu0 0.0
        %1955 = vmatpush1.msra.mxu0 0.0
        %1956 = vmatprep.subr.mxu0 0.0
        %1957 = vmatpush1.msra.mxu0 0.0
        %1958 = vmatprep.subr.mxu0 0.0
        %1959 = vmatpush1.msra.mxu0 0.0
        %1960 = vmatprep.subr.mxu0 0.0
        %1961 = vmatpush1.msra.mxu0 0.0
        %1962 = vmatprep.subr.mxu0 0.0
        %1963 = vmatpush1.msra.mxu0 0.0
        %1964 = vmatprep.subr.mxu0 0.0
        %1965 = vmatpush1.msra.mxu0 0.0
        %1966 = vmatprep.subr.mxu0 0.0
        %1967 = vmatpush1.msra.mxu0 0.0
        %v1968 = vand.u32 %v1739, 4294901760
        %v1969 = vsub.f32 %v1739, %v1968
        %1970 = vmatprep.subr.mxu0 %v1969
        %v1971 = vand.u32 %v1738, 4294901760
        %v1972 = vsub.f32 %v1738, %v1971
        %1973 = vmatpush1.msra.mxu0 %v1972
        %v1974 = vand.u32 %v1737, 4294901760
        %v1975 = vsub.f32 %v1737, %v1974
        %1976 = vmatprep.subr.mxu0 %v1975
        %v1977 = vand.u32 %v1736, 4294901760
        %v1978 = vsub.f32 %v1736, %v1977
        %1979 = vmatpush1.msra.mxu0 %v1978
        %v1980 = vand.u32 %v1735, 4294901760
        %v1981 = vsub.f32 %v1735, %v1980
        %1982 = vmatprep.subr.mxu0 %v1981
        %v1983 = vand.u32 %v1734, 4294901760
        %v1984 = vsub.f32 %v1734, %v1983
        %1985 = vmatpush1.msra.mxu0 %v1984
        %v1986 = vand.u32 %v1733, 4294901760
        %v1987 = vsub.f32 %v1733, %v1986
        %1988 = vmatprep.subr.mxu0 %v1987
        %v1989 = vand.u32 %v1732, 4294901760
        %v1990 = vsub.f32 %v1732, %v1989
        %1991 = vmatpush1.msra.mxu0 %v1990
        %1992 = vmatprep.subr.mxu0 0.0
        %1993 = vmatpush2.msra.mxu0 0.0
        %1994 = vmatprep.subr.mxu0 0.0
        %1995 = vmatpush2.msra.mxu0 0.0
        %1996 = vmatprep.subr.mxu0 0.0
        %1997 = vmatpush2.msra.mxu0 0.0
        %1998 = vmatprep.subr.mxu0 0.0
        %1999 = vmatpush2.msra.mxu0 0.0
        %2000 = vmatprep.subr.mxu0 0.0
        %2001 = vmatpush2.msra.mxu0 0.0
        %2002 = vmatprep.subr.mxu0 0.0
        %2003 = vmatpush2.msra.mxu0 0.0
        %2004 = vmatprep.subr.mxu0 0.0
        %2005 = vmatpush2.msra.mxu0 0.0
        %2006 = vmatprep.subr.mxu0 0.0
        %2007 = vmatpush2.msra.mxu0 0.0
        %2008 = vmatprep.subr.mxu0 0.0
        %2009 = vmatpush2.msra.mxu0 0.0
        %2010 = vmatprep.subr.mxu0 0.0
        %2011 = vmatpush2.msra.mxu0 0.0
        %2012 = vmatprep.subr.mxu0 0.0
        %2013 = vmatpush2.msra.mxu0 0.0
        %2014 = vmatprep.subr.mxu0 0.0
        %2015 = vmatpush2.msra.mxu0 0.0
        %2016 = vmatprep.subr.mxu0 0.0
        %2017 = vmatpush2.msra.mxu0 0.0
        %2018 = vmatprep.subr.mxu0 0.0
        %2019 = vmatpush2.msra.mxu0 0.0
        %2020 = vmatprep.subr.mxu0 0.0
        %2021 = vmatpush2.msra.mxu0 0.0
        %2022 = vmatprep.subr.mxu0 0.0
        %2023 = vmatpush2.msra.mxu0 0.0
        %2024 = vmatprep.mubr.f32.mxu0 0.0
        %v2025 = vand.u32 %v1746, 4294901760
        %v2026 = vsub.f32 %v1746, %v2025
        %2027 = vmatmul.mubr.f32.gmra.mxu0 %v2026
        %v2028 = vpop.f32.mrf.mxu0
        %v2029 = vadd.f32 %v1940, %v2028
        %v2030 = vpop.f32.mrf.mxu0
        %v2031 = vadd.f32 %v1942, %v2030
        %2032 = vdwg.mxu0
        %2033 = vmatprep.subr.mxu0 0.0
        %2034 = vmatpush1.msra.mxu0 0.0
        %2035 = vmatprep.subr.mxu0 0.0
        %2036 = vmatpush1.msra.mxu0 0.0
        %2037 = vmatprep.subr.mxu0 0.0
        %2038 = vmatpush1.msra.mxu0 0.0
        %2039 = vmatprep.subr.mxu0 0.0
        %2040 = vmatpush1.msra.mxu0 0.0
        %2041 = vmatprep.subr.mxu0 0.0
        %2042 = vmatpush1.msra.mxu0 0.0
        %2043 = vmatprep.subr.mxu0 0.0
        %2044 = vmatpush1.msra.mxu0 0.0
        %2045 = vmatprep.subr.mxu0 0.0
        %2046 = vmatpush1.msra.mxu0 0.0
        %2047 = vmatprep.subr.mxu0 0.0
        %2048 = vmatpush1.msra.mxu0 0.0
        %2049 = vmatprep.subr.mxu0 0.0
        %2050 = vmatpush1.msra.mxu0 0.0
        %2051 = vmatprep.subr.mxu0 0.0
        %2052 = vmatpush1.msra.mxu0 0.0
        %2053 = vmatprep.subr.mxu0 0.0
        %2054 = vmatpush1.msra.mxu0 0.0
        %2055 = vmatprep.subr.mxu0 0.0
        %2056 = vmatpush1.msra.mxu0 0.0
        %v2057 = vand.u32 %v1739, 4294901760
        %2058 = vmatprep.subr.mxu0 %v2057
        %v2059 = vand.u32 %v1738, 4294901760
        %2060 = vmatpush1.msra.mxu0 %v2059
        %v2061 = vand.u32 %v1737, 4294901760
        %2062 = vmatprep.subr.mxu0 %v2061
        %v2063 = vand.u32 %v1736, 4294901760
        %2064 = vmatpush1.msra.mxu0 %v2063
        %v2065 = vand.u32 %v1735, 4294901760
        %2066 = vmatprep.subr.mxu0 %v2065
        %v2067 = vand.u32 %v1734, 4294901760
        %2068 = vmatpush1.msra.mxu0 %v2067
        %v2069 = vand.u32 %v1733, 4294901760
        %2070 = vmatprep.subr.mxu0 %v2069
        %v2071 = vand.u32 %v1732, 4294901760
        %2072 = vmatpush1.msra.mxu0 %v2071
        %2073 = vmatprep.subr.mxu0 0.0
        %2074 = vmatpush2.msra.mxu0 0.0
        %2075 = vmatprep.subr.mxu0 0.0
        %2076 = vmatpush2.msra.mxu0 0.0
        %2077 = vmatprep.subr.mxu0 0.0
        %2078 = vmatpush2.msra.mxu0 0.0
        %2079 = vmatprep.subr.mxu0 0.0
        %2080 = vmatpush2.msra.mxu0 0.0
        %2081 = vmatprep.subr.mxu0 0.0
        %2082 = vmatpush2.msra.mxu0 0.0
        %2083 = vmatprep.subr.mxu0 0.0
        %2084 = vmatpush2.msra.mxu0 0.0
        %2085 = vmatprep.subr.mxu0 0.0
        %2086 = vmatpush2.msra.mxu0 0.0
        %2087 = vmatprep.subr.mxu0 0.0
        %2088 = vmatpush2.msra.mxu0 0.0
        %2089 = vmatprep.subr.mxu0 0.0
        %2090 = vmatpush2.msra.mxu0 0.0
        %2091 = vmatprep.subr.mxu0 0.0
        %2092 = vmatpush2.msra.mxu0 0.0
        %2093 = vmatprep.subr.mxu0 0.0
        %2094 = vmatpush2.msra.mxu0 0.0
        %2095 = vmatprep.subr.mxu0 0.0
        %2096 = vmatpush2.msra.mxu0 0.0
        %2097 = vmatprep.subr.mxu0 0.0
        %2098 = vmatpush2.msra.mxu0 0.0
        %2099 = vmatprep.subr.mxu0 0.0
        %2100 = vmatpush2.msra.mxu0 0.0
        %2101 = vmatprep.subr.mxu0 0.0
        %2102 = vmatpush2.msra.mxu0 0.0
        %2103 = vmatprep.subr.mxu0 0.0
        %2104 = vmatpush2.msra.mxu0 0.0
        %2105 = vmatprep.mubr.f32.mxu0 0.0
        %v2106 = vand.u32 %v1746, 4294901760
        %v2107 = vsub.f32 %v1746, %v2106
        %v2108 = vand.u32 %v2107, 4294901760
        %2109 = vmatmul.mubr.f32.gmra.mxu0 %v2108
        %v2110 = vpop.f32.mrf.mxu0
        %v2111 = vadd.f32 %v2029, %v2110
        %v2112 = vpop.f32.mrf.mxu0
        %v2113 = vadd.f32 %v2031, %v2112
        %2114 = vdwg.mxu0
        %2115 = vmatprep.subr.mxu0 0.0
        %2116 = vmatpush1.msra.mxu0 0.0
        %2117 = vmatprep.subr.mxu0 0.0
        %2118 = vmatpush1.msra.mxu0 0.0
        %2119 = vmatprep.subr.mxu0 0.0
        %2120 = vmatpush1.msra.mxu0 0.0
        %2121 = vmatprep.subr.mxu0 0.0
        %2122 = vmatpush1.msra.mxu0 0.0
        %2123 = vmatprep.subr.mxu0 0.0
        %2124 = vmatpush1.msra.mxu0 0.0
        %2125 = vmatprep.subr.mxu0 0.0
        %2126 = vmatpush1.msra.mxu0 0.0
        %2127 = vmatprep.subr.mxu0 0.0
        %2128 = vmatpush1.msra.mxu0 0.0
        %2129 = vmatprep.subr.mxu0 0.0
        %2130 = vmatpush1.msra.mxu0 0.0
        %2131 = vmatprep.subr.mxu0 0.0
        %2132 = vmatpush1.msra.mxu0 0.0
        %2133 = vmatprep.subr.mxu0 0.0
        %2134 = vmatpush1.msra.mxu0 0.0
        %2135 = vmatprep.subr.mxu0 0.0
        %2136 = vmatpush1.msra.mxu0 0.0
        %2137 = vmatprep.subr.mxu0 0.0
        %2138 = vmatpush1.msra.mxu0 0.0
        %v2139 = vand.u32 %v1739, 4294901760
        %v2140 = vsub.f32 %v1739, %v2139
        %v2141 = vand.u32 %v2140, 4294901760
        %2142 = vmatprep.subr.mxu0 %v2141
        %v2143 = vand.u32 %v1738, 4294901760
        %v2144 = vsub.f32 %v1738, %v2143
        %v2145 = vand.u32 %v2144, 4294901760
        %2146 = vmatpush1.msra.mxu0 %v2145
        %v2147 = vand.u32 %v1737, 4294901760
        %v2148 = vsub.f32 %v1737, %v2147
        %v2149 = vand.u32 %v2148, 4294901760
        %2150 = vmatprep.subr.mxu0 %v2149
        %v2151 = vand.u32 %v1736, 4294901760
        %v2152 = vsub.f32 %v1736, %v2151
        %v2153 = vand.u32 %v2152, 4294901760
        %2154 = vmatpush1.msra.mxu0 %v2153
        %v2155 = vand.u32 %v1735, 4294901760
        %v2156 = vsub.f32 %v1735, %v2155
        %v2157 = vand.u32 %v2156, 4294901760
        %2158 = vmatprep.subr.mxu0 %v2157
        %v2159 = vand.u32 %v1734, 4294901760
        %v2160 = vsub.f32 %v1734, %v2159
        %v2161 = vand.u32 %v2160, 4294901760
        %2162 = vmatpush1.msra.mxu0 %v2161
        %v2163 = vand.u32 %v1733, 4294901760
        %v2164 = vsub.f32 %v1733, %v2163
        %v2165 = vand.u32 %v2164, 4294901760
        %2166 = vmatprep.subr.mxu0 %v2165
        %v2167 = vand.u32 %v1732, 4294901760
        %v2168 = vsub.f32 %v1732, %v2167
        %v2169 = vand.u32 %v2168, 4294901760
        %2170 = vmatpush1.msra.mxu0 %v2169
        %2171 = vmatprep.subr.mxu0 0.0
        %2172 = vmatpush2.msra.mxu0 0.0
        %2173 = vmatprep.subr.mxu0 0.0
        %2174 = vmatpush2.msra.mxu0 0.0
        %2175 = vmatprep.subr.mxu0 0.0
        %2176 = vmatpush2.msra.mxu0 0.0
        %2177 = vmatprep.subr.mxu0 0.0
        %2178 = vmatpush2.msra.mxu0 0.0
        %2179 = vmatprep.subr.mxu0 0.0
        %2180 = vmatpush2.msra.mxu0 0.0
        %2181 = vmatprep.subr.mxu0 0.0
        %2182 = vmatpush2.msra.mxu0 0.0
        %2183 = vmatprep.subr.mxu0 0.0
        %2184 = vmatpush2.msra.mxu0 0.0
        %2185 = vmatprep.subr.mxu0 0.0
        %2186 = vmatpush2.msra.mxu0 0.0
        %2187 = vmatprep.subr.mxu0 0.0
        %2188 = vmatpush2.msra.mxu0 0.0
        %2189 = vmatprep.subr.mxu0 0.0
        %2190 = vmatpush2.msra.mxu0 0.0
        %2191 = vmatprep.subr.mxu0 0.0
        %2192 = vmatpush2.msra.mxu0 0.0
        %2193 = vmatprep.subr.mxu0 0.0
        %2194 = vmatpush2.msra.mxu0 0.0
        %2195 = vmatprep.subr.mxu0 0.0
        %2196 = vmatpush2.msra.mxu0 0.0
        %2197 = vmatprep.subr.mxu0 0.0
        %2198 = vmatpush2.msra.mxu0 0.0
        %2199 = vmatprep.subr.mxu0 0.0
        %2200 = vmatpush2.msra.mxu0 0.0
        %2201 = vmatprep.subr.mxu0 0.0
        %2202 = vmatpush2.msra.mxu0 0.0
        %2203 = vmatprep.mubr.f32.mxu0 0.0
        %v2204 = vand.u32 %v1746, 4294901760
        %2205 = vmatmul.mubr.f32.gmra.mxu0 %v2204
        %v2206 = vpop.f32.mrf.mxu0
        %v2207 = vadd.f32 %v2111, %v2206
        %v2208 = vpop.f32.mrf.mxu0
        %v2209 = vadd.f32 %v2113, %v2208
        %2210 = vdwg.mxu0
        %2211 = vmatprep.subr.mxu0 0.0
        %2212 = vmatpush1.msra.mxu0 0.0
        %2213 = vmatprep.subr.mxu0 0.0
        %2214 = vmatpush1.msra.mxu0 0.0
        %2215 = vmatprep.subr.mxu0 0.0
        %2216 = vmatpush1.msra.mxu0 0.0
        %2217 = vmatprep.subr.mxu0 0.0
        %2218 = vmatpush1.msra.mxu0 0.0
        %2219 = vmatprep.subr.mxu0 0.0
        %2220 = vmatpush1.msra.mxu0 0.0
        %2221 = vmatprep.subr.mxu0 0.0
        %2222 = vmatpush1.msra.mxu0 0.0
        %2223 = vmatprep.subr.mxu0 0.0
        %2224 = vmatpush1.msra.mxu0 0.0
        %2225 = vmatprep.subr.mxu0 0.0
        %2226 = vmatpush1.msra.mxu0 0.0
        %2227 = vmatprep.subr.mxu0 0.0
        %2228 = vmatpush1.msra.mxu0 0.0
        %2229 = vmatprep.subr.mxu0 0.0
        %2230 = vmatpush1.msra.mxu0 0.0
        %2231 = vmatprep.subr.mxu0 0.0
        %2232 = vmatpush1.msra.mxu0 0.0
        %2233 = vmatprep.subr.mxu0 0.0
        %2234 = vmatpush1.msra.mxu0 0.0
        %v2235 = vand.u32 %v1739, 4294901760
        %2236 = vmatprep.subr.mxu0 %v2235
        %v2237 = vand.u32 %v1738, 4294901760
        %2238 = vmatpush1.msra.mxu0 %v2237
        %v2239 = vand.u32 %v1737, 4294901760
        %2240 = vmatprep.subr.mxu0 %v2239
        %v2241 = vand.u32 %v1736, 4294901760
        %2242 = vmatpush1.msra.mxu0 %v2241
        %v2243 = vand.u32 %v1735, 4294901760
        %2244 = vmatprep.subr.mxu0 %v2243
        %v2245 = vand.u32 %v1734, 4294901760
        %2246 = vmatpush1.msra.mxu0 %v2245
        %v2247 = vand.u32 %v1733, 4294901760
        %2248 = vmatprep.subr.mxu0 %v2247
        %v2249 = vand.u32 %v1732, 4294901760
        %2250 = vmatpush1.msra.mxu0 %v2249
        %2251 = vmatprep.subr.mxu0 0.0
        %2252 = vmatpush2.msra.mxu0 0.0
        %2253 = vmatprep.subr.mxu0 0.0
        %2254 = vmatpush2.msra.mxu0 0.0
        %2255 = vmatprep.subr.mxu0 0.0
        %2256 = vmatpush2.msra.mxu0 0.0
        %2257 = vmatprep.subr.mxu0 0.0
        %2258 = vmatpush2.msra.mxu0 0.0
        %2259 = vmatprep.subr.mxu0 0.0
        %2260 = vmatpush2.msra.mxu0 0.0
        %2261 = vmatprep.subr.mxu0 0.0
        %2262 = vmatpush2.msra.mxu0 0.0
        %2263 = vmatprep.subr.mxu0 0.0
        %2264 = vmatpush2.msra.mxu0 0.0
        %2265 = vmatprep.subr.mxu0 0.0
        %2266 = vmatpush2.msra.mxu0 0.0
        %2267 = vmatprep.subr.mxu0 0.0
        %2268 = vmatpush2.msra.mxu0 0.0
        %2269 = vmatprep.subr.mxu0 0.0
        %2270 = vmatpush2.msra.mxu0 0.0
        %2271 = vmatprep.subr.mxu0 0.0
        %2272 = vmatpush2.msra.mxu0 0.0
        %2273 = vmatprep.subr.mxu0 0.0
        %2274 = vmatpush2.msra.mxu0 0.0
        %2275 = vmatprep.subr.mxu0 0.0
        %2276 = vmatpush2.msra.mxu0 0.0
        %2277 = vmatprep.subr.mxu0 0.0
        %2278 = vmatpush2.msra.mxu0 0.0
        %2279 = vmatprep.subr.mxu0 0.0
        %2280 = vmatpush2.msra.mxu0 0.0
        %2281 = vmatprep.subr.mxu0 0.0
        %2282 = vmatpush2.msra.mxu0 0.0
        %2283 = vmatprep.mubr.f32.mxu0 0.0
        %v2284 = vand.u32 %v1746, 4294901760
        %2285 = vmatmul.mubr.f32.gmra.mxu0 %v2284
        %v2286 = vpop.f32.mrf.mxu0
        %v2287 = vadd.f32 %v2207, %v2286
        %v2288 = vpop.f32.mrf.mxu0
        %v2289 = vadd.f32 %v2209, %v2288
        %2290 = vdwg.mxu0
        %v2293 = vcombine.low %v2287, %v2289
        %v2295 = vunpack.c.l.s4 1983009808
        %v2296 = vunpack.c.0.s8 %v2295
        %v2297 = vlaneseq
        %v2298 = vshrl.u32 %v2297, 7
        %v2299 = vsub.s32 %v2296, %v2298
        %v2300 = vrot.slane %v2293, %v2299
        %2302 = vst [vmem:[%s137] sm:$0xf] %v2300
        %s2303 = sand.u32 %s71, 1
        %s2304 = scalar_lea.sflag [#allocation3], %s2303
        %s2305 = sand.u32 %s71, 1
        %s2306 = smul.addr %s2305, 4
        %s2307 = scalar_lea.vmem [#allocation2], %s2306
        // Predicated region
        $region29: #{tpu_custom_call.1} parent=27 // pred_check
          %p2308 = pneg %p81
        $region30: #{tpu_custom_call.1} parent=27 // pred_check_branch
          %2310 = sbr.rel (%p2308) target = $region32
        $region31: #{tpu_custom_call.1} parent=27 // pred_region
          %s2311 = smul.u32 2, %s16
          %s2313 = ssub.s32 64, 64
          %2314 = vsyncadd %s2304, %s2313
          %s2315 = smul.addr %s2311, 32
          %s2316 = scalar_lea.hbm %s2, %s2315
          %s2318 = sshll.u32 %s2307, 4
          %s2319 = int_to_ptr.vmem [resolvable:$true] %s2318
          %2321 = dma.vmem_to_hbm [thread:$0]  %s2319, 64, %s2316, %s2304
        $region32: #{tpu_custom_call.1} parent=27 // pred_fallthru
          _
      $region28: #{tpu_custom_call.1} parent=5 // pred_fallthru
        _
      %p2322 = scmp.le.s32.totalorder 2, %s11
      // Predicated region
      $region33: #{tpu_custom_call.1} parent=5 // pred_check
        %p2323 = pneg %p2322
      $region34: #{tpu_custom_call.1} parent=5 // pred_check_branch
        %2325 = sbr.rel (%p2323) target = $region36
      $region35: #{tpu_custom_call.1} parent=5 // pred_region
        %s2326 = ssub.s32 %s11, 2
        // Predicated region
        $region37: #{tpu_custom_call.1} parent=35 // pred_check
          %p2327 = pneg %p87
        $region38: #{tpu_custom_call.1} parent=35 // pred_check_branch
          %2329 = sbr.rel (%p2327) target = $region40
        $region39: #{tpu_custom_call.1} parent=35 // pred_region
          %s2330 = sand.u32 %s72, 1
          %s2331 = scalar_lea.sflag [#allocation3], %s2330
          %s2332 = sand.u32 %s72, 1
          %s2333 = smul.addr %s2332, 4
          %s2334 = scalar_lea.vmem [#allocation2], %s2333
          %2335 = dma.done %s2331, 64
        $region40: #{tpu_custom_call.1} parent=35 // pred_fallthru
          _
      $region36: #{tpu_custom_call.1} parent=5 // pred_fallthru
        _
    $region6: #{tpu_custom_call.1} parent=1 // loop_footer
      %s15 = sadd.s32 1, %s11
    $region7: #{tpu_custom_call.1} parent=1 // loop_footer_branch
      %10 = sbr.rel target = $region3
    $region8: #{tpu_custom_call.1} parent=1 // loop_exit
      _
    %2336 = vsyncpa [#allocation3], 1
    %s2337 = scalar_lea.sflag [#allocation3], 1
    %2338 = vsyncpa %s2337, 1

</llo_original>
